<compile_context>
chip_gen: v5e
topology: v5e:2x2
jax: 0.10.0
libtpu: 0.0.40
codegen_flags: <defaults>
</compile_context>

<pallas_src>
import jax
import jax.numpy as jnp
import numpy as np
from jax.experimental import pallas as pl
from jax.experimental.pallas import tpu as pltpu

# Fixed convolution weights from the PyTorch module.
GRAD_W = ((0.0, 1.0, 0.0),
          (1.0, -4.0, 1.0),
          (0.0, 1.0, 0.0))
LOWPASS_W = ((0.0947, 0.1183, 0.0947),
             (0.1183, 0.1478, 0.1183),
             (0.0947, 0.1183, 0.0947))

_LP_CENTER = 0.1478
_LP_EDGE = 0.1183
_LP_CORNER = 0.0947
_HALO = 8   # sublane-aligned halo slab; only 2 rows are actually consumed


def _make_kernel(H, W, Hp, Wp, TH):
    """Per-(batch, row-tile) kernel closed over the static geometry."""
    N = TH + 2 * _HALO                       # rows of the assembled (haloed) tile
    col_wrap_mask = (Wp == W)                # lane rolls would wrap real data
    term_mask_needed = (Hp > H) or (Wp > W)  # padded rows/cols exist in the main block

    def kernel(f_m, f_t, f_b, v_m, v_t, v_b, r_m, r_t, r_b,
               vis_score_ref, ir_score_ref, psum_ref,
               f_ext, v_ext, r_ext):
        t = pl.program_id(1)
        n_t = pl.num_programs(1)
        # Frame-edge tiles: the halo slab corresponds to zero padding -> zero it.
        keep_top = jnp.where(t == 0, 0.0, 1.0)
        keep_bot = jnp.where(t == n_t - 1, 0.0, 1.0)

        def assemble(ext, m_ref, t_ref, b_ref):
            ext[0:_HALO, :] = t_ref[0] * keep_top
            ext[_HALO:_HALO + TH, :] = m_ref[0]
            ext[_HALO + TH:, :] = b_ref[0] * keep_bot

        assemble(f_ext, f_m, f_t, f_b)
        assemble(v_ext, v_m, v_t, v_b)
        assemble(r_ext, r_m, r_t, r_b)

        fused = f_ext[...]   # (N, Wp)
        vis = v_ext[...]
        ir = r_ext[...]

        # 1-D masks (review: no full-size iota/compare passes).
        col = jax.lax.broadcasted_iota(jnp.int32, (1, Wp), 1)
        if col_wrap_mask:
            m_col_pos = col < (Wp - 1)   # valid lanes of out[j] = x[j+1]
            m_col_neg = col >= 1         # valid lanes of out[j] = x[j-1]

        def shift_rows(x, d):
            # out[i, j] = x[i + d, j].  No mask: the wrap only corrupts ext rows
            # 0 / N-1 (and, after the 2nd conv, rows 1 / N-2), none of which are
            # within the kept [_HALO, _HALO+TH) window (halo is 8 rows).
            return pltpu.roll(x, shift=(-d) % N, axis=0)

        def shift_cols(x, d):
            r = pltpu.roll(x, shift=(-d) % Wp, axis=1)
            if col_wrap_mask:
                # Only needed when W == Wp: otherwise the wrapped-in lanes are
                # the zero-padded columns (== the conv's zero padding).
                r = jnp.where(m_col_pos if d > 0 else m_col_neg, r, 0.0)
            return r

        def grad_parts(x):
            vsum = shift_rows(x, -1) + shift_rows(x, +1)   # x[i-1,j] + x[i+1,j]
            hsum = shift_cols(x, -1) + shift_cols(x, +1)   # x[i,j-1] + x[i,j+1]
            cross = vsum + hsum
            return cross - 4.0 * x, vsum, cross

        def grad_only(x):
            g, _, _ = grad_parts(x)
            return g

        def lowpass_from(x, vsum, cross):
            # 3x3 low-pass; the 4 diagonal taps come from 2 lane rolls of vsum.
            diag = shift_cols(vsum, -1) + shift_cols(vsum, +1)
            return _LP_CENTER * x + _LP_EDGE * cross + _LP_CORNER * diag

        f_grad = grad_only(fused)
        v_grad, v_vsum, v_cross = grad_parts(vis)
        r_grad, r_vsum, r_cross = grad_parts(ir)

        lp_v = lowpass_from(vis, v_vsum, v_cross)
        lp_r = lowpass_from(ir, r_vsum, r_cross)

        # Zero the low-pass outside the true HxW image so the second conv sees
        # exactly the zero padding of the unpadded reference.
        rowi = jax.lax.broadcasted_iota(jnp.int32, (N, 1), 0)
        grow = t * TH + rowi - _HALO                                  # global row
        row_okf = ((grow >= 0) & (grow < H)).astype(jnp.float32)      # (N, 1)
        if Wp > W:
            col_okf = (col < W).astype(jnp.float32)                   # (1, Wp)
            vmask = row_okf * col_okf                                 # (N, Wp)
        else:
            vmask = row_okf                                           # (N, 1), broadcasts
        lp_v = lp_v * vmask
        lp_r = lp_r * vmask

        v_gl = jnp.abs(grad_only(lp_v))
        r_gl = jnp.abs(grad_only(lp_r))

        # sign(a - min(a, b)) == (a > b) for the non-negative operands here.
        vis_score = jnp.where(v_gl > r_gl, 1.0, 0.0)

        lo, hi = _HALO, _HALO + TH           # kept (main) rows, static slice
        vs_m = vis_score[lo:hi]
        is_m = 1.0 - vs_m
        fg = f_grad[lo:hi]
        vg = v_grad[lo:hi]
        rg = r_grad[lo:hi]

        # Merged loss term (same denominator for both means in the wrapper).
        term = vs_m * jnp.square(fg - vg) + is_m * jnp.square(fg - rg)
        if term_mask_needed:
            term = term * vmask[lo:hi]

        # {0,1} is exact in bf16; halves the score HBM writeback.
        vis_score_ref[0] = vs_m.astype(jnp.bfloat16)
        ir_score_ref[0] = is_m.astype(jnp.bfloat16)

        # Fold rows to one vreg-high slab (aligned VPU adds only) ...
        acc = term[0:8, :]
        for r0 in range(8, TH, 8):
            acc = acc + term[r0:r0 + 8, :]
        # ... then fold lanes to a single lane-dense (8, 128) partial sum.
        lacc = acc[:, 0:128]
        for c0 in range(128, Wp, 128):
            lacc = lacc + acc[:, c0:c0 + 128]
        psum_ref[0, 0] = lacc

    return kernel


def _vmem_budget_bytes():
    # Per-generation scoped-VMEM cap with ~15% headroom for Mosaic internal
    # scratch: ~54 MiB on v7x (64 MiB parts), ~108 MiB on v5e/v6e (128 MiB).
    cap = 64 * 1024 * 1024
    try:
        info = pltpu.get_tpu_info()
        c = getattr(info, "vmem_capacity_bytes", None)
        if c:
            cap = int(c)
    except Exception:
        pass
    return int(cap * 0.85)


def adaptive_gradient_l2_loss(fused_img, vis, ir, *, tile_rows=None):
    """Matches AdaptiveGradientL2Loss.forward. Inputs: NCHW with C == 1, float32."""
    B, C, H, W = fused_img.shape
    assert C == 1, "conv weights are single-channel (in=out=1)"

    Wp = ((W + 127) // 128) * 128
    Hp0 = ((H + 7) // 8) * 8

    # Row-tile size: multiple of 16 (bf16 score blocks), ~1 MiB f32 per block,
    # capped at 256 rows (review: TH ~= 128-256).
    if tile_rows is None:
        th = min(256, max(16, ((1 << 20) // (4 * Wp)) // 16 * 16))
        th = min(th, ((Hp0 + 15) // 16) * 16)
    else:
        th = max(16, (int(tile_rows) // 16) * 16)
    n_t = -(-H // th)
    th = ((-(-H // n_t) + 15) // 16) * 16     # balance tiles (last tile not mostly pad)
    Hp = n_t * th
    N = th + 2 * _HALO

    # TODO(synk): if callers can hand over bf16 frames, read them as bf16 and
    # upcast in-kernel to halve input HBM traffic (biggest win on v5e).
    def prep(x):
        x = x.reshape(B, H, W).astype(jnp.float32)
        if (Hp, Wp) != (H, W):
            x = jnp.pad(x, ((0, 0), (0, Hp - H), (0, Wp - W)))
        return x

    f, v, r = prep(fused_img), prep(vis), prep(ir)

    nh8 = th // 8              # 8-row blocks per tile
    last8 = Hp // 8 - 1
    main_spec = pl.BlockSpec((1, th, Wp), lambda b, t: (b, t, 0))
    top_spec = pl.BlockSpec((1, 8, Wp),
                            lambda b, t: (b, jnp.maximum(t * nh8 - 1, 0), 0))
    bot_spec = pl.BlockSpec((1, 8, Wp),
                            lambda b, t: (b, jnp.minimum((t + 1) * nh8, last8), 0))
    score_spec = pl.BlockSpec((1, th, Wp), lambda b, t: (b, t, 0))
    psum_spec = pl.BlockSpec((1, 1, 8, 128), lambda b, t: (b, t, 0, 0))

    out_shapes = (
        jax.ShapeDtypeStruct((B, Hp, Wp), jnp.bfloat16),      # vis_score (padded, {0,1})
        jax.ShapeDtypeStruct((B, Hp, Wp), jnp.bfloat16),      # ir_score
        jax.ShapeDtypeStruct((B, n_t, 8, 128), jnp.float32),  # merged partial loss sums
    )

    # VMEM estimate: double-buffered pipeline blocks + assembled-tile scratch
    # + ~14 live image-sized f32 intermediates + slack.
    main_b, halo_b = th * Wp * 4, 8 * Wp * 4
    score_b, psum_b, ext_b = th * Wp * 2, 8 * 128 * 4, N * Wp * 4
    vmem_est = (2 * (3 * main_b + 6 * halo_b + 2 * score_b + psum_b)
                + (3 + 14) * ext_b + (2 << 20))
    vmem_limit = int(min(_vmem_budget_bytes(), max(32 * 1024 * 1024, vmem_est)))

    n_px = B * Hp * Wp
    cost = pl.CostEstimate(flops=70 * n_px, transcendentals=0,
                           bytes_accessed=16 * n_px)

    vis_score_p, ir_score_p, psum = pl.pallas_call(
        _make_kernel(H, W, Hp, Wp, th),
        out_shape=out_shapes,
        grid_spec=pltpu.PrefetchScalarGridSpec(
            num_scalar_prefetch=0,
            grid=(B, n_t),
            in_specs=[main_spec, top_spec, bot_spec,
                      main_spec, top_spec, bot_spec,
                      main_spec, top_spec, bot_spec],
            out_specs=[score_spec, score_spec, psum_spec],
            scratch_shapes=[pltpu.VMEM((N, Wp), jnp.float32) for _ in range(3)],
        ),
        compiler_params=pltpu.CompilerParams(
            dimension_semantics=("parallel", "parallel"),   # no cross-step state
            vmem_limit_bytes=vmem_limit,
        ),
        cost_estimate=cost,
    )(f, f, f, v, v, v, r, r, r)

    loss = jnp.sum(psum) / float(B * C * H * W)
    # TODO(synk): if the consumer can take padded bf16 score maps, skip this
    # un-pad slice/cast to save two image-sized HBM passes outside the kernel.
    vis_score = vis_score_p[:, :H, :W].astype(jnp.float32).reshape(B, 1, H, W)
    ir_score = ir_score_p[:, :H, :W].astype(jnp.float32).reshape(B, 1, H, W)
    return loss, vis_score, ir_score


# ---------------- plain-JAX / numpy reference for verification ----------------
def _conv3x3_ref(x, w):
    w = jnp.asarray(w, jnp.float32).reshape(1, 1, 3, 3)
    return jax.lax.conv_general_dilated(
        x, w, window_strides=(1, 1), padding=((1, 1), (1, 1)),
        dimension_numbers=('NCHW', 'OIHW', 'NCHW'))


def _verify(fused, vis, ir, loss, vis_score, ir_score):
    vgl = np.asarray(jnp.abs(_conv3x3_ref(_conv3x3_ref(vis, LOWPASS_W), GRAD_W)), np.float64)
    igl = np.asarray(jnp.abs(_conv3x3_ref(_conv3x3_ref(ir, LOWPASS_W), GRAD_W)), np.float64)
    vs_ref = np.sign(vgl - np.minimum(vgl, igl))
    fg = np.asarray(_conv3x3_ref(fused, GRAD_W), np.float64)
    vg = np.asarray(_conv3x3_ref(vis, GRAD_W), np.float64)
    ig = np.asarray(_conv3x3_ref(ir, GRAD_W), np.float64)

    vs = np.asarray(vis_score, np.float64)
    isc = np.asarray(ir_score, np.float64)
    np.testing.assert_allclose(isc, 1.0 - vs, rtol=0, atol=0)

    # Score maps must match except (possibly) at exact numerical ties of the two
    # gradient magnitudes (our FP accumulation order differs from the conv's).
    ties = np.abs(vgl - igl) <= 1e-5 * (np.abs(vgl) + np.abs(igl)) + 1e-6
    mism = vs != vs_ref
    assert not np.any(mism & ~ties), "score mismatch away from numerical ties"

    # Loss: reference formula evaluated with the kernel's (detached) scores.
    n = vs.size
    loss_ref = (np.sum(vs * np.square(fg - vg)) + np.sum((1.0 - vs) * np.square(fg - ig))) / n
    np.testing.assert_allclose(float(loss), loss_ref, rtol=2e-4, atol=1e-5)
    if not np.any(mism):
        loss_full = (np.mean(vs_ref * np.square(fg - vg))
                     + np.mean((1.0 - vs_ref) * np.square(fg - ig)))
        np.testing.assert_allclose(float(loss), loss_full, rtol=2e-4, atol=1e-5)


if __name__ == "__main__":
    key = jax.random.PRNGKey(0)

    # (B, H, W, tile_rows): covers single-tile, multi-tile w/ row+col padding,
    # and the exactly-aligned Wp == W / Hp == H path (wrap-masked lane shifts).
    cases = [(2, 16, 16, None),
             (2, 40, 150, 16),
             (1, 32, 128, 16)]

    for (B, H, W, tr) in cases:
        key, k1, k2, k3 = jax.random.split(key, 4)
        fused = jax.random.uniform(k1, (B, 1, H, W), dtype=jnp.float32)
        vis = jax.random.uniform(k2, (B, 1, H, W), dtype=jnp.float32)
        ir = jax.random.uniform(k3, (B, 1, H, W), dtype=jnp.float32)

        loss, vis_score, ir_score = jax.block_until_ready(
            adaptive_gradient_l2_loss(fused, vis, ir, tile_rows=tr))
        _verify(fused, vis, ir, loss, vis_score, ir_score)

    print("KERNEL_OK")
</pallas_src>

<mosaic_0001>
module attributes {stable_mosaic.version = 11 : i64} {
  func.func @kernel(%arg0: i32, %arg1: i32, %arg2: memref<1x16x128xf32, #tpu.memory_space<vmem>>, %arg3: memref<1x8x128xf32, #tpu.memory_space<vmem>>, %arg4: memref<1x8x128xf32, #tpu.memory_space<vmem>>, %arg5: memref<1x16x128xf32, #tpu.memory_space<vmem>>, %arg6: memref<1x8x128xf32, #tpu.memory_space<vmem>>, %arg7: memref<1x8x128xf32, #tpu.memory_space<vmem>>, %arg8: memref<1x16x128xf32, #tpu.memory_space<vmem>>, %arg9: memref<1x8x128xf32, #tpu.memory_space<vmem>>, %arg10: memref<1x8x128xf32, #tpu.memory_space<vmem>>, %arg11: memref<1x16x128xbf16, #tpu.memory_space<vmem>>, %arg12: memref<1x16x128xbf16, #tpu.memory_space<vmem>>, %arg13: memref<1x1x8x128xf32, #tpu.memory_space<vmem>>, %arg14: memref<32x128xf32, #tpu.memory_space<vmem>>, %arg15: memref<32x128xf32, #tpu.memory_space<vmem>>, %arg16: memref<32x128xf32, #tpu.memory_space<vmem>>) attributes {dimension_semantics = [#tpu.dimension_semantics<parallel>, #tpu.dimension_semantics<parallel>], iteration_bounds = array<i64: 2, 1>, scalar_prefetch = 0 : i64, scratch_operands = 3 : i64, tpu.core_type = #tpu.core_type<tc>, window_params = [{transform_indices = @transform_0, window_bounds = array<i64: 1, 16, 128>}, {transform_indices = @transform_1, window_bounds = array<i64: 1, 8, 128>}, {transform_indices = @transform_2, window_bounds = array<i64: 1, 8, 128>}, {transform_indices = @transform_3, window_bounds = array<i64: 1, 16, 128>}, {transform_indices = @transform_4, window_bounds = array<i64: 1, 8, 128>}, {transform_indices = @transform_5, window_bounds = array<i64: 1, 8, 128>}, {transform_indices = @transform_6, window_bounds = array<i64: 1, 16, 128>}, {transform_indices = @transform_7, window_bounds = array<i64: 1, 8, 128>}, {transform_indices = @transform_8, window_bounds = array<i64: 1, 8, 128>}, {transform_indices = @transform_9, window_bounds = array<i64: 1, 16, 128>}, {transform_indices = @transform_10, window_bounds = array<i64: 1, 16, 128>}, {transform_indices = @transform_11, window_bounds = array<i64: 1, 1, 8, 128>}]} {
    %c0_i32 = arith.constant 0 : i32
    %0 = arith.cmpi eq, %arg1, %c0_i32 : i32
    %cst = arith.constant 0.000000e+00 : f32
    %cst_0 = arith.constant 1.000000e+00 : f32
    %1 = arith.select %0, %cst, %cst_0 : f32
    %c0_i32_1 = arith.constant 0 : i32
    %2 = arith.cmpi eq, %arg1, %c0_i32_1 : i32
    %cst_2 = arith.constant 0.000000e+00 : f32
    %cst_3 = arith.constant 1.000000e+00 : f32
    %3 = arith.select %2, %cst_2, %cst_3 : f32
    %c0 = arith.constant 0 : index
    %c0_4 = arith.constant 0 : index
    %c0_5 = arith.constant 0 : index
    %4 = vector.load %arg3[%c0, %c0_4, %c0_5] : memref<1x8x128xf32, #tpu.memory_space<vmem>>, vector<1x8x128xf32>
    %5 = vector.shape_cast %4 : vector<1x8x128xf32> to vector<8x128xf32>
    %6 = vector.broadcast %1 : f32 to vector<8x128xf32>
    %7 = arith.mulf %5, %6 : vector<8x128xf32>
    %c0_6 = arith.constant 0 : index
    %c0_7 = arith.constant 0 : index
    %8 = vector.load %arg14[%c0_6, %c0_7] : memref<32x128xf32, #tpu.memory_space<vmem>>, vector<8x128xf32>
    tpu.vector_store %arg14[%c0_6, %c0_7], %7 {strides = array<i32>} : memref<32x128xf32, #tpu.memory_space<vmem>>, vector<8x128xf32>,
    %c0_8 = arith.constant 0 : index
    %c0_9 = arith.constant 0 : index
    %c0_10 = arith.constant 0 : index
    %9 = vector.load %arg2[%c0_8, %c0_9, %c0_10] : memref<1x16x128xf32, #tpu.memory_space<vmem>>, vector<1x16x128xf32>
    %10 = vector.shape_cast %9 : vector<1x16x128xf32> to vector<16x128xf32>
    %c8 = arith.constant 8 : index
    %c0_11 = arith.constant 0 : index
    %11 = vector.load %arg14[%c8, %c0_11] : memref<32x128xf32, #tpu.memory_space<vmem>>, vector<16x128xf32>
    tpu.vector_store %arg14[%c8, %c0_11], %10 {strides = array<i32>} : memref<32x128xf32, #tpu.memory_space<vmem>>, vector<16x128xf32>,
    %c0_12 = arith.constant 0 : index
    %c0_13 = arith.constant 0 : index
    %c0_14 = arith.constant 0 : index
    %12 = vector.load %arg4[%c0_12, %c0_13, %c0_14] : memref<1x8x128xf32, #tpu.memory_space<vmem>>, vector<1x8x128xf32>
    %13 = vector.shape_cast %12 : vector<1x8x128xf32> to vector<8x128xf32>
    %14 = vector.broadcast %3 : f32 to vector<8x128xf32>
    %15 = arith.mulf %13, %14 : vector<8x128xf32>
    %c24 = arith.constant 24 : index
    %c0_15 = arith.constant 0 : index
    %16 = vector.load %arg14[%c24, %c0_15] : memref<32x128xf32, #tpu.memory_space<vmem>>, vector<8x128xf32>
    tpu.vector_store %arg14[%c24, %c0_15], %15 {strides = array<i32>} : memref<32x128xf32, #tpu.memory_space<vmem>>, vector<8x128xf32>,
    %c0_16 = arith.constant 0 : index
    %c0_17 = arith.constant 0 : index
    %c0_18 = arith.constant 0 : index
    %17 = vector.load %arg6[%c0_16, %c0_17, %c0_18] : memref<1x8x128xf32, #tpu.memory_space<vmem>>, vector<1x8x128xf32>
    %18 = vector.shape_cast %17 : vector<1x8x128xf32> to vector<8x128xf32>
    %19 = vector.broadcast %1 : f32 to vector<8x128xf32>
    %20 = arith.mulf %18, %19 : vector<8x128xf32>
    %c0_19 = arith.constant 0 : index
    %c0_20 = arith.constant 0 : index
    %21 = vector.load %arg15[%c0_19, %c0_20] : memref<32x128xf32, #tpu.memory_space<vmem>>, vector<8x128xf32>
    tpu.vector_store %arg15[%c0_19, %c0_20], %20 {strides = array<i32>} : memref<32x128xf32, #tpu.memory_space<vmem>>, vector<8x128xf32>,
    %c0_21 = arith.constant 0 : index
    %c0_22 = arith.constant 0 : index
    %c0_23 = arith.constant 0 : index
    %22 = vector.load %arg5[%c0_21, %c0_22, %c0_23] : memref<1x16x128xf32, #tpu.memory_space<vmem>>, vector<1x16x128xf32>
    %23 = vector.shape_cast %22 : vector<1x16x128xf32> to vector<16x128xf32>
    %c8_24 = arith.constant 8 : index
    %c0_25 = arith.constant 0 : index
    %24 = vector.load %arg15[%c8_24, %c0_25] : memref<32x128xf32, #tpu.memory_space<vmem>>, vector<16x128xf32>
    tpu.vector_store %arg15[%c8_24, %c0_25], %23 {strides = array<i32>} : memref<32x128xf32, #tpu.memory_space<vmem>>, vector<16x128xf32>,
    %c0_26 = arith.constant 0 : index
    %c0_27 = arith.constant 0 : index
    %c0_28 = arith.constant 0 : index
    %25 = vector.load %arg7[%c0_26, %c0_27, %c0_28] : memref<1x8x128xf32, #tpu.memory_space<vmem>>, vector<1x8x128xf32>
    %26 = vector.shape_cast %25 : vector<1x8x128xf32> to vector<8x128xf32>
    %27 = vector.broadcast %3 : f32 to vector<8x128xf32>
    %28 = arith.mulf %26, %27 : vector<8x128xf32>
    %c24_29 = arith.constant 24 : index
    %c0_30 = arith.constant 0 : index
    %29 = vector.load %arg15[%c24_29, %c0_30] : memref<32x128xf32, #tpu.memory_space<vmem>>, vector<8x128xf32>
    tpu.vector_store %arg15[%c24_29, %c0_30], %28 {strides = array<i32>} : memref<32x128xf32, #tpu.memory_space<vmem>>, vector<8x128xf32>,
    %c0_31 = arith.constant 0 : index
    %c0_32 = arith.constant 0 : index
    %c0_33 = arith.constant 0 : index
    %30 = vector.load %arg9[%c0_31, %c0_32, %c0_33] : memref<1x8x128xf32, #tpu.memory_space<vmem>>, vector<1x8x128xf32>
    %31 = vector.shape_cast %30 : vector<1x8x128xf32> to vector<8x128xf32>
    %32 = vector.broadcast %1 : f32 to vector<8x128xf32>
    %33 = arith.mulf %31, %32 : vector<8x128xf32>
    %c0_34 = arith.constant 0 : index
    %c0_35 = arith.constant 0 : index
    %34 = vector.load %arg16[%c0_34, %c0_35] : memref<32x128xf32, #tpu.memory_space<vmem>>, vector<8x128xf32>
    tpu.vector_store %arg16[%c0_34, %c0_35], %33 {strides = array<i32>} : memref<32x128xf32, #tpu.memory_space<vmem>>, vector<8x128xf32>,
    %c0_36 = arith.constant 0 : index
    %c0_37 = arith.constant 0 : index
    %c0_38 = arith.constant 0 : index
    %35 = vector.load %arg8[%c0_36, %c0_37, %c0_38] : memref<1x16x128xf32, #tpu.memory_space<vmem>>, vector<1x16x128xf32>
    %36 = vector.shape_cast %35 : vector<1x16x128xf32> to vector<16x128xf32>
    %c8_39 = arith.constant 8 : index
    %c0_40 = arith.constant 0 : index
    %37 = vector.load %arg16[%c8_39, %c0_40] : memref<32x128xf32, #tpu.memory_space<vmem>>, vector<16x128xf32>
    tpu.vector_store %arg16[%c8_39, %c0_40], %36 {strides = array<i32>} : memref<32x128xf32, #tpu.memory_space<vmem>>, vector<16x128xf32>,
    %c0_41 = arith.constant 0 : index
    %c0_42 = arith.constant 0 : index
    %c0_43 = arith.constant 0 : index
    %38 = vector.load %arg10[%c0_41, %c0_42, %c0_43] : memref<1x8x128xf32, #tpu.memory_space<vmem>>, vector<1x8x128xf32>
    %39 = vector.shape_cast %38 : vector<1x8x128xf32> to vector<8x128xf32>
    %40 = vector.broadcast %3 : f32 to vector<8x128xf32>
    %41 = arith.mulf %39, %40 : vector<8x128xf32>
    %c24_44 = arith.constant 24 : index
    %c0_45 = arith.constant 0 : index
    %42 = vector.load %arg16[%c24_44, %c0_45] : memref<32x128xf32, #tpu.memory_space<vmem>>, vector<8x128xf32>
    tpu.vector_store %arg16[%c24_44, %c0_45], %41 {strides = array<i32>} : memref<32x128xf32, #tpu.memory_space<vmem>>, vector<8x128xf32>,
    %c0_46 = arith.constant 0 : index
    %c0_47 = arith.constant 0 : index
    %43 = vector.load %arg14[%c0_46, %c0_47] : memref<32x128xf32, #tpu.memory_space<vmem>>, vector<32x128xf32>
    %c0_48 = arith.constant 0 : index
    %c0_49 = arith.constant 0 : index
    %44 = vector.load %arg15[%c0_48, %c0_49] : memref<32x128xf32, #tpu.memory_space<vmem>>, vector<32x128xf32>
    %c0_50 = arith.constant 0 : index
    %c0_51 = arith.constant 0 : index
    %45 = vector.load %arg16[%c0_50, %c0_51] : memref<32x128xf32, #tpu.memory_space<vmem>>, vector<32x128xf32>
    %46 = tpu.iota {dimensions = array<i32: 1>} : vector<1x128xi32>
    %c1_i32 = arith.constant 1 : i32
    %47 = tpu.dynamic_rotate %43 by %c1_i32 dim 0 : vector<32x128xf32>, i32 -> vector<32x128xf32>
    %c31_i32 = arith.constant 31 : i32
    %48 = tpu.dynamic_rotate %43 by %c31_i32 dim 0 : vector<32x128xf32>, i32 -> vector<32x128xf32>
    %49 = arith.addf %47, %48 : vector<32x128xf32>
    %c1_i32_52 = arith.constant 1 : i32
    %50 = tpu.dynamic_rotate %43 by %c1_i32_52 dim 1 : vector<32x128xf32>, i32 -> vector<32x128xf32>
    %c127_i32 = arith.constant 127 : i32
    %51 = tpu.dynamic_rotate %43 by %c127_i32 dim 1 : vector<32x128xf32>, i32 -> vector<32x128xf32>
    %52 = arith.addf %50, %51 : vector<32x128xf32>
    %53 = arith.addf %49, %52 : vector<32x128xf32>
    %cst_53 = arith.constant 4.000000e+00 : f32
    %54 = vector.broadcast %cst_53 : f32 to vector<32x128xf32>
    %55 = arith.mulf %54, %43 : vector<32x128xf32>
    %56 = arith.subf %53, %55 : vector<32x128xf32>
    %c1_i32_54 = arith.constant 1 : i32
    %57 = tpu.dynamic_rotate %44 by %c1_i32_54 dim 0 : vector<32x128xf32>, i32 -> vector<32x128xf32>
    %c31_i32_55 = arith.constant 31 : i32
    %58 = tpu.dynamic_rotate %44 by %c31_i32_55 dim 0 : vector<32x128xf32>, i32 -> vector<32x128xf32>
    %59 = arith.addf %57, %58 : vector<32x128xf32>
    %c1_i32_56 = arith.constant 1 : i32
    %60 = tpu.dynamic_rotate %44 by %c1_i32_56 dim 1 : vector<32x128xf32>, i32 -> vector<32x128xf32>
    %c127_i32_57 = arith.constant 127 : i32
    %61 = tpu.dynamic_rotate %44 by %c127_i32_57 dim 1 : vector<32x128xf32>, i32 -> vector<32x128xf32>
    %62 = arith.addf %60, %61 : vector<32x128xf32>
    %63 = arith.addf %59, %62 : vector<32x128xf32>
    %cst_58 = arith.constant 4.000000e+00 : f32
    %64 = vector.broadcast %cst_58 : f32 to vector<32x128xf32>
    %65 = arith.mulf %64, %44 : vector<32x128xf32>
    %66 = arith.subf %63, %65 : vector<32x128xf32>
    %c1_i32_59 = arith.constant 1 : i32
    %67 = tpu.dynamic_rotate %45 by %c1_i32_59 dim 0 : vector<32x128xf32>, i32 -> vector<32x128xf32>
    %c31_i32_60 = arith.constant 31 : i32
    %68 = tpu.dynamic_rotate %45 by %c31_i32_60 dim 0 : vector<32x128xf32>, i32 -> vector<32x128xf32>
    %69 = arith.addf %67, %68 : vector<32x128xf32>
    %c1_i32_61 = arith.constant 1 : i32
    %70 = tpu.dynamic_rotate %45 by %c1_i32_61 dim 1 : vector<32x128xf32>, i32 -> vector<32x128xf32>
    %c127_i32_62 = arith.constant 127 : i32
    %71 = tpu.dynamic_rotate %45 by %c127_i32_62 dim 1 : vector<32x128xf32>, i32 -> vector<32x128xf32>
    %72 = arith.addf %70, %71 : vector<32x128xf32>
    %73 = arith.addf %69, %72 : vector<32x128xf32>
    %cst_63 = arith.constant 4.000000e+00 : f32
    %74 = vector.broadcast %cst_63 : f32 to vector<32x128xf32>
    %75 = arith.mulf %74, %45 : vector<32x128xf32>
    %76 = arith.subf %73, %75 : vector<32x128xf32>
    %c1_i32_64 = arith.constant 1 : i32
    %77 = tpu.dynamic_rotate %59 by %c1_i32_64 dim 1 : vector<32x128xf32>, i32 -> vector<32x128xf32>
    %c127_i32_65 = arith.constant 127 : i32
    %78 = tpu.dynamic_rotate %59 by %c127_i32_65 dim 1 : vector<32x128xf32>, i32 -> vector<32x128xf32>
    %79 = arith.addf %77, %78 : vector<32x128xf32>
    %cst_66 = arith.constant 1.478000e-01 : f32
    %80 = vector.broadcast %cst_66 : f32 to vector<32x128xf32>
    %81 = arith.mulf %80, %44 : vector<32x128xf32>
    %cst_67 = arith.constant 1.183000e-01 : f32
    %82 = vector.broadcast %cst_67 : f32 to vector<32x128xf32>
    %83 = arith.mulf %82, %63 : vector<32x128xf32>
    %84 = arith.addf %81, %83 : vector<32x128xf32>
    %cst_68 = arith.constant 9.470000e-02 : f32
    %85 = vector.broadcast %cst_68 : f32 to vector<32x128xf32>
    %86 = arith.mulf %85, %79 : vector<32x128xf32>
    %87 = arith.addf %84, %86 : vector<32x128xf32>
    %c1_i32_69 = arith.constant 1 : i32
    %88 = tpu.dynamic_rotate %69 by %c1_i32_69 dim 1 : vector<32x128xf32>, i32 -> vector<32x128xf32>
    %c127_i32_70 = arith.constant 127 : i32
    %89 = tpu.dynamic_rotate %69 by %c127_i32_70 dim 1 : vector<32x128xf32>, i32 -> vector<32x128xf32>
    %90 = arith.addf %88, %89 : vector<32x128xf32>
    %cst_71 = arith.constant 1.478000e-01 : f32
    %91 = vector.broadcast %cst_71 : f32 to vector<32x128xf32>
    %92 = arith.mulf %91, %45 : vector<32x128xf32>
    %cst_72 = arith.constant 1.183000e-01 : f32
    %93 = vector.broadcast %cst_72 : f32 to vector<32x128xf32>
    %94 = arith.mulf %93, %73 : vector<32x128xf32>
    %95 = arith.addf %92, %94 : vector<32x128xf32>
    %cst_73 = arith.constant 9.470000e-02 : f32
    %96 = vector.broadcast %cst_73 : f32 to vector<32x128xf32>
    %97 = arith.mulf %96, %90 : vector<32x128xf32>
    %98 = arith.addf %95, %97 : vector<32x128xf32>
    %99 = tpu.iota {dimensions = array<i32: 0>} : vector<32x1xi32>
    %c16_i32 = arith.constant 16 : i32
    %100 = arith.muli %arg1, %c16_i32 : i32
    %101 = vector.broadcast %100 : i32 to vector<32x1xi32>
    %102 = arith.addi %101, %99 : vector<32x1xi32>
    %c8_i32 = arith.constant 8 : i32
    %103 = vector.broadcast %c8_i32 : i32 to vector<32x1xi32>
    %104 = arith.subi %102, %103 : vector<32x1xi32>
    %c0_i32_74 = arith.constant 0 : i32
    %105 = vector.broadcast %c0_i32_74 : i32 to vector<32x1xi32>
    %106 = arith.cmpi sge, %104, %105 : vector<32x1xi32>
    %c16_i32_75 = arith.constant 16 : i32
    %107 = vector.broadcast %c16_i32_75 : i32 to vector<32x1xi32>
    %108 = arith.cmpi slt, %104, %107 : vector<32x1xi32>
    %109 = arith.andi %106, %108 : vector<32x1xi1>
    %110 = arith.extui %109 : vector<32x1xi1> to vector<32x1xi32>
    %111 = arith.sitofp %110 : vector<32x1xi32> to vector<32x1xf32>
    %c16_i32_76 = arith.constant 16 : i32
    %112 = vector.broadcast %c16_i32_76 : i32 to vector<1x128xi32>
    %113 = arith.cmpi slt, %46, %112 : vector<1x128xi32>
    %114 = arith.extui %113 : vector<1x128xi1> to vector<1x128xi32>
    %115 = arith.sitofp %114 : vector<1x128xi32> to vector<1x128xf32>
    %116 = vector.broadcast %111 : vector<32x1xf32> to vector<32x128xf32>
    %117 = vector.broadcast %115 : vector<1x128xf32> to vector<32x128xf32>
    %118 = arith.mulf %116, %117 : vector<32x128xf32>
    %119 = arith.mulf %87, %118 : vector<32x128xf32>
    %120 = arith.mulf %98, %118 : vector<32x128xf32>
    %c1_i32_77 = arith.constant 1 : i32
    %121 = tpu.dynamic_rotate %119 by %c1_i32_77 dim 0 : vector<32x128xf32>, i32 -> vector<32x128xf32>
    %c31_i32_78 = arith.constant 31 : i32
    %122 = tpu.dynamic_rotate %119 by %c31_i32_78 dim 0 : vector<32x128xf32>, i32 -> vector<32x128xf32>
    %123 = arith.addf %121, %122 : vector<32x128xf32>
    %c1_i32_79 = arith.constant 1 : i32
    %124 = tpu.dynamic_rotate %119 by %c1_i32_79 dim 1 : vector<32x128xf32>, i32 -> vector<32x128xf32>
    %c127_i32_80 = arith.constant 127 : i32
    %125 = tpu.dynamic_rotate %119 by %c127_i32_80 dim 1 : vector<32x128xf32>, i32 -> vector<32x128xf32>
    %126 = arith.addf %124, %125 : vector<32x128xf32>
    %127 = arith.addf %123, %126 : vector<32x128xf32>
    %cst_81 = arith.constant 4.000000e+00 : f32
    %128 = vector.broadcast %cst_81 : f32 to vector<32x128xf32>
    %129 = arith.mulf %128, %119 : vector<32x128xf32>
    %130 = arith.subf %127, %129 : vector<32x128xf32>
    %131 = math.absf %130 : vector<32x128xf32>
    %c1_i32_82 = arith.constant 1 : i32
    %132 = tpu.dynamic_rotate %120 by %c1_i32_82 dim 0 : vector<32x128xf32>, i32 -> vector<32x128xf32>
    %c31_i32_83 = arith.constant 31 : i32
    %133 = tpu.dynamic_rotate %120 by %c31_i32_83 dim 0 : vector<32x128xf32>, i32 -> vector<32x128xf32>
    %134 = arith.addf %132, %133 : vector<32x128xf32>
    %c1_i32_84 = arith.constant 1 : i32
    %135 = tpu.dynamic_rotate %120 by %c1_i32_84 dim 1 : vector<32x128xf32>, i32 -> vector<32x128xf32>
    %c127_i32_85 = arith.constant 127 : i32
    %136 = tpu.dynamic_rotate %120 by %c127_i32_85 dim 1 : vector<32x128xf32>, i32 -> vector<32x128xf32>
    %137 = arith.addf %135, %136 : vector<32x128xf32>
    %138 = arith.addf %134, %137 : vector<32x128xf32>
    %cst_86 = arith.constant 4.000000e+00 : f32
    %139 = vector.broadcast %cst_86 : f32 to vector<32x128xf32>
    %140 = arith.mulf %139, %120 : vector<32x128xf32>
    %141 = arith.subf %138, %140 : vector<32x128xf32>
    %142 = math.absf %141 : vector<32x128xf32>
    %143 = arith.cmpf ogt, %131, %142 : vector<32x128xf32>
    %cst_87 = arith.constant 1.000000e+00 : f32
    %cst_88 = arith.constant 0.000000e+00 : f32
    %144 = vector.broadcast %cst_87 : f32 to vector<32x128xf32>
    %145 = vector.broadcast %cst_88 : f32 to vector<32x128xf32>
    %146 = arith.select %143, %144, %145 : vector<32x128xi1>, vector<32x128xf32>
    %147 = vector.extract_strided_slice %146 {offsets = [8, 0], sizes = [16, 128], strides = [1, 1]} : vector<32x128xf32> to vector<16x128xf32>
    %cst_89 = arith.constant 1.000000e+00 : f32
    %148 = vector.broadcast %cst_89 : f32 to vector<16x128xf32>
    %149 = arith.subf %148, %147 : vector<16x128xf32>
    %150 = vector.extract_strided_slice %56 {offsets = [8, 0], sizes = [16, 128], strides = [1, 1]} : vector<32x128xf32> to vector<16x128xf32>
    %151 = vector.extract_strided_slice %66 {offsets = [8, 0], sizes = [16, 128], strides = [1, 1]} : vector<32x128xf32> to vector<16x128xf32>
    %152 = vector.extract_strided_slice %76 {offsets = [8, 0], sizes = [16, 128], strides = [1, 1]} : vector<32x128xf32> to vector<16x128xf32>
    %153 = arith.subf %150, %151 : vector<16x128xf32>
    %154 = arith.mulf %153, %153 : vector<16x128xf32>
    %155 = arith.mulf %147, %154 : vector<16x128xf32>
    %156 = arith.subf %150, %152 : vector<16x128xf32>
    %157 = arith.mulf %156, %156 : vector<16x128xf32>
    %158 = arith.mulf %149, %157 : vector<16x128xf32>
    %159 = arith.addf %155, %158 : vector<16x128xf32>
    %160 = vector.extract_strided_slice %118 {offsets = [8, 0], sizes = [16, 128], strides = [1, 1]} : vector<32x128xf32> to vector<16x128xf32>
    %161 = arith.mulf %159, %160 : vector<16x128xf32>
    %162 = arith.truncf %147 : vector<16x128xf32> to vector<16x128xbf16>
    %c0_90 = arith.constant 0 : index
    %c0_91 = arith.constant 0 : index
    %c0_92 = arith.constant 0 : index
    %163 = vector.load %arg11[%c0_90, %c0_91, %c0_92] : memref<1x16x128xbf16, #tpu.memory_space<vmem>>, vector<1x16x128xbf16>
    %164 = vector.shape_cast %163 : vector<1x16x128xbf16> to vector<16x128xbf16>
    %165 = vector.shape_cast %162 : vector<16x128xbf16> to vector<1x16x128xbf16>
    tpu.vector_store %arg11[%c0_90, %c0_91, %c0_92], %165 {strides = array<i32>} : memref<1x16x128xbf16, #tpu.memory_space<vmem>>, vector<1x16x128xbf16>,
    %166 = arith.truncf %149 : vector<16x128xf32> to vector<16x128xbf16>
    %c0_93 = arith.constant 0 : index
    %c0_94 = arith.constant 0 : index
    %c0_95 = arith.constant 0 : index
    %167 = vector.load %arg12[%c0_93, %c0_94, %c0_95] : memref<1x16x128xbf16, #tpu.memory_space<vmem>>, vector<1x16x128xbf16>
    %168 = vector.shape_cast %167 : vector<1x16x128xbf16> to vector<16x128xbf16>
    %169 = vector.shape_cast %166 : vector<16x128xbf16> to vector<1x16x128xbf16>
    tpu.vector_store %arg12[%c0_93, %c0_94, %c0_95], %169 {strides = array<i32>} : memref<1x16x128xbf16, #tpu.memory_space<vmem>>, vector<1x16x128xbf16>,
    %170 = vector.extract_strided_slice %161 {offsets = [0, 0], sizes = [8, 128], strides = [1, 1]} : vector<16x128xf32> to vector<8x128xf32>
    %171 = vector.extract_strided_slice %161 {offsets = [8, 0], sizes = [8, 128], strides = [1, 1]} : vector<16x128xf32> to vector<8x128xf32>
    %172 = arith.addf %170, %171 : vector<8x128xf32>
    %c0_96 = arith.constant 0 : index
    %c0_97 = arith.constant 0 : index
    %c0_98 = arith.constant 0 : index
    %c0_99 = arith.constant 0 : index
    %173 = vector.load %arg13[%c0_96, %c0_97, %c0_98, %c0_99] : memref<1x1x8x128xf32, #tpu.memory_space<vmem>>, vector<1x1x8x128xf32>
    %174 = vector.shape_cast %173 : vector<1x1x8x128xf32> to vector<8x128xf32>
    %175 = vector.shape_cast %172 : vector<8x128xf32> to vector<1x1x8x128xf32>
    tpu.vector_store %arg13[%c0_96, %c0_97, %c0_98, %c0_99], %175 {strides = array<i32>} : memref<1x1x8x128xf32, #tpu.memory_space<vmem>>, vector<1x1x8x128xf32>,
    return
  }
  func.func @transform_0(%arg0: i32, %arg1: i32) -> (i32, i32, i32) {
    %c0_i32 = arith.constant 0 : i32
    %c0_i32_0 = arith.constant 0 : i32
    return %arg0, %arg1, %c0_i32 : i32, i32, i32
  }
  func.func @transform_1(%arg0: i32, %arg1: i32) -> (i32, i32, i32) {
    %c2_i32 = arith.constant 2 : i32
    %0 = arith.muli %arg1, %c2_i32 : i32
    %c1_i32 = arith.constant 1 : i32
    %1 = arith.subi %0, %c1_i32 : i32
    %c0_i32 = arith.constant 0 : i32
    %2 = arith.maxsi %1, %c0_i32 : i32
    %c0_i32_0 = arith.constant 0 : i32
    %c0_i32_1 = arith.constant 0 : i32
    return %arg0, %2, %c0_i32_0 : i32, i32, i32
  }
  func.func @transform_2(%arg0: i32, %arg1: i32) -> (i32, i32, i32) {
    %c1_i32 = arith.constant 1 : i32
    %0 = arith.addi %arg1, %c1_i32 : i32
    %c2_i32 = arith.constant 2 : i32
    %1 = arith.muli %0, %c2_i32 : i32
    %c1_i32_0 = arith.constant 1 : i32
    %2 = arith.minsi %1, %c1_i32_0 : i32
    %c0_i32 = arith.constant 0 : i32
    %c0_i32_1 = arith.constant 0 : i32
    return %arg0, %2, %c0_i32 : i32, i32, i32
  }
  func.func @transform_3(%arg0: i32, %arg1: i32) -> (i32, i32, i32) {
    %c0_i32 = arith.constant 0 : i32
    %c0_i32_0 = arith.constant 0 : i32
    return %arg0, %arg1, %c0_i32 : i32, i32, i32
  }
  func.func @transform_4(%arg0: i32, %arg1: i32) -> (i32, i32, i32) {
    %c2_i32 = arith.constant 2 : i32
    %0 = arith.muli %arg1, %c2_i32 : i32
    %c1_i32 = arith.constant 1 : i32
    %1 = arith.subi %0, %c1_i32 : i32
    %c0_i32 = arith.constant 0 : i32
    %2 = arith.maxsi %1, %c0_i32 : i32
    %c0_i32_0 = arith.constant 0 : i32
    %c0_i32_1 = arith.constant 0 : i32
    return %arg0, %2, %c0_i32_0 : i32, i32, i32
  }
  func.func @transform_5(%arg0: i32, %arg1: i32) -> (i32, i32, i32) {
    %c1_i32 = arith.constant 1 : i32
    %0 = arith.addi %arg1, %c1_i32 : i32
    %c2_i32 = arith.constant 2 : i32
    %1 = arith.muli %0, %c2_i32 : i32
    %c1_i32_0 = arith.constant 1 : i32
    %2 = arith.minsi %1, %c1_i32_0 : i32
    %c0_i32 = arith.constant 0 : i32
    %c0_i32_1 = arith.constant 0 : i32
    return %arg0, %2, %c0_i32 : i32, i32, i32
  }
  func.func @transform_6(%arg0: i32, %arg1: i32) -> (i32, i32, i32) {
    %c0_i32 = arith.constant 0 : i32
    %c0_i32_0 = arith.constant 0 : i32
    return %arg0, %arg1, %c0_i32 : i32, i32, i32
  }
  func.func @transform_7(%arg0: i32, %arg1: i32) -> (i32, i32, i32) {
    %c2_i32 = arith.constant 2 : i32
    %0 = arith.muli %arg1, %c2_i32 : i32
    %c1_i32 = arith.constant 1 : i32
    %1 = arith.subi %0, %c1_i32 : i32
    %c0_i32 = arith.constant 0 : i32
    %2 = arith.maxsi %1, %c0_i32 : i32
    %c0_i32_0 = arith.constant 0 : i32
    %c0_i32_1 = arith.constant 0 : i32
    return %arg0, %2, %c0_i32_0 : i32, i32, i32
  }
  func.func @transform_8(%arg0: i32, %arg1: i32) -> (i32, i32, i32) {
    %c1_i32 = arith.constant 1 : i32
    %0 = arith.addi %arg1, %c1_i32 : i32
    %c2_i32 = arith.constant 2 : i32
    %1 = arith.muli %0, %c2_i32 : i32
    %c1_i32_0 = arith.constant 1 : i32
    %2 = arith.minsi %1, %c1_i32_0 : i32
    %c0_i32 = arith.constant 0 : i32
    %c0_i32_1 = arith.constant 0 : i32
    return %arg0, %2, %c0_i32 : i32, i32, i32
  }
  func.func @transform_9(%arg0: i32, %arg1: i32) -> (i32, i32, i32) {
    %c0_i32 = arith.constant 0 : i32
    %c0_i32_0 = arith.constant 0 : i32
    return %arg0, %arg1, %c0_i32 : i32, i32, i32
  }
  func.func @transform_10(%arg0: i32, %arg1: i32) -> (i32, i32, i32) {
    %c0_i32 = arith.constant 0 : i32
    %c0_i32_0 = arith.constant 0 : i32
    return %arg0, %arg1, %c0_i32 : i32, i32, i32
  }
  func.func @transform_11(%arg0: i32, %arg1: i32) -> (i32, i32, i32, i32) {
    %c0_i32 = arith.constant 0 : i32
    %c0_i32_0 = arith.constant 0 : i32
    %c0_i32_1 = arith.constant 0 : i32
    return %arg0, %arg1, %c0_i32, %c0_i32_0 : i32, i32, i32, i32
  }
}

</mosaic_0001>

<llo_original>
// kernel: tpu_custom_call.1
$region0: #{tpu_custom_call.1}
  #allocation0 [shape = 'u32[]', space=smem, size = 0x4, offset = 0x4, fixed_abs, tag = 'smem constant byte address 0x4 - core index']
  #allocation1 [shape = 'u32[72,128]{1,0:T(1,128)}', space=vmem, size = 0x9000, scoped, tag = 'internal scratch']
  #allocation2 [shape = 'f32[32,128]{1,0:T(8,128)}', space=vmem, size = 0x4000, scoped, tag = 'scratch operand']
  #allocation3 [shape = 'f32[32,128]{1,0:T(8,128)}', space=vmem, size = 0x4000, scoped, tag = 'scratch operand']
  #allocation4 [shape = 'f32[32,128]{1,0:T(8,128)}', space=vmem, size = 0x4000, scoped, tag = 'scratch operand']
  %s0 = inlined_call_operand.hbm [shape: f32[2,16,128], index: 0, kind: input, shape index: {}]
  %s1 = inlined_call_operand.hbm [shape: f32[2,16,128], index: 1, kind: input, shape index: {}]
  %s2 = inlined_call_operand.hbm [shape: f32[2,16,128], index: 2, kind: input, shape index: {}]
  %s3 = inlined_call_operand.hbm [shape: f32[2,16,128], index: 3, kind: input, shape index: {}]
  %s4 = inlined_call_operand.hbm [shape: f32[2,16,128], index: 4, kind: input, shape index: {}]
  %s5 = inlined_call_operand.hbm [shape: f32[2,16,128], index: 5, kind: input, shape index: {}]
  %s6 = inlined_call_operand.hbm [shape: f32[2,16,128], index: 6, kind: input, shape index: {}]
  %s7 = inlined_call_operand.hbm [shape: f32[2,16,128], index: 7, kind: input, shape index: {}]
  %s8 = inlined_call_operand.hbm [shape: f32[2,16,128], index: 8, kind: input, shape index: {}]
  %s9 = inlined_call_operand.hbm [shape: bf16[2,16,128], index: 9, kind: output, shape index: {0}]
  %s10 = inlined_call_operand.hbm [shape: bf16[2,16,128], index: 10, kind: output, shape index: {1}]
  %s11 = inlined_call_operand.hbm [shape: f32[2,1,8,128], index: 11, kind: output, shape index: {2}]
  %12 = xla_tuple %s9, %s10, %s11
  %s13 = sld [smem:[#allocation0]]
  $region121: #{tpu_custom_call.1} parent=0
    _
  %s15 = ssub.s32 1, %s13
  %s16 = scalar_select 0, %s15, %s13
  $region1: #{tpu_custom_call.1} parent=0
    #allocation5 [shape = 'u8[16384]{0}', space=vmem, size = 0x4000, scoped, tag = 'input window, operand 0']
    #allocation6 [shape = 's32[2]{0}', space=sflag, size = 0x8, scoped, tag = 'scoped memory for tpu_custom_call.1']
    #allocation7 [shape = 's32[2]{0}', space=sflag, size = 0x8, scoped, tag = 'scoped memory for tpu_custom_call.1']
    #allocation8 [shape = 'u8[8192]{0}', space=vmem, size = 0x2000, scoped, tag = 'input window, operand 1']
    #allocation9 [shape = 's32[2]{0}', space=sflag, size = 0x8, scoped, tag = 'scoped memory for tpu_custom_call.1']
    #allocation10 [shape = 'u8[8192]{0}', space=vmem, size = 0x2000, scoped, tag = 'input window, operand 2']
    #allocation11 [shape = 'u8[16384]{0}', space=vmem, size = 0x4000, scoped, tag = 'input window, operand 3']
    #allocation12 [shape = 's32[2]{0}', space=sflag, size = 0x8, scoped, tag = 'scoped memory for tpu_custom_call.1']
    #allocation13 [shape = 'u8[8192]{0}', space=vmem, size = 0x2000, scoped, tag = 'input window, operand 4']
    #allocation14 [shape = 'u8[8192]{0}', space=vmem, size = 0x2000, scoped, tag = 'input window, operand 5']
    #allocation15 [shape = 's32[2]{0}', space=sflag, size = 0x8, scoped, tag = 'scoped memory for tpu_custom_call.1']
    #allocation16 [shape = 'u8[16384]{0}', space=vmem, size = 0x4000, scoped, tag = 'input window, operand 6']
    #allocation17 [shape = 'u8[8192]{0}', space=vmem, size = 0x2000, scoped, tag = 'input window, operand 7']
    #allocation18 [shape = 's32[2]{0}', space=sflag, size = 0x8, scoped, tag = 'scoped memory for tpu_custom_call.1']
    #allocation19 [shape = 'u8[8192]{0}', space=vmem, size = 0x2000, scoped, tag = 'input window, operand 8']
    #allocation20 [shape = 'u8[8192]{0}', space=vmem, size = 0x2000, scoped, tag = 'output window, operand 0']
    #allocation21 [shape = 'u8[8192]{0}', space=vmem, size = 0x2000, scoped, tag = 'output window, operand 1']
    #allocation22 [shape = 's32[2]{0}', space=sflag, size = 0x8, scoped, tag = 'scoped memory for tpu_custom_call.1']
    #allocation23 [shape = 'u8[8192]{0}', space=vmem, size = 0x2000, scoped, tag = 'output window, operand 2']
    %17 = vsyncpa [#allocation6], 0
    %s18 = scalar_lea.sflag [#allocation6], 1
    %19 = vsyncpa %s18, 0
    %20 = vsyncpa [#allocation9], 0
    %s21 = scalar_lea.sflag [#allocation9], 1
    %22 = vsyncpa %s21, 0
    %23 = vsyncpa [#allocation12], 0
    %s24 = scalar_lea.sflag [#allocation12], 1
    %25 = vsyncpa %s24, 0
    %26 = vsyncpa [#allocation15], 0
    %s27 = scalar_lea.sflag [#allocation15], 1
    %28 = vsyncpa %s27, 0
    %29 = vsyncpa [#allocation18], 0
    %s30 = scalar_lea.sflag [#allocation18], 1
    %31 = vsyncpa %s30, 0
    %32 = vsyncpa [#allocation7], 0
    %s33 = scalar_lea.sflag [#allocation7], 1
    %34 = vsyncpa %s33, 0
    %35 = vsyncpa [#allocation22], 0
    %s36 = scalar_lea.sflag [#allocation22], 1
    %37 = vsyncpa %s36, 0
    loop: start=0, step=1, limit=4
    $region2: #{tpu_custom_call.1} parent=1 // loop_pre_header
      _
    $region3: #{tpu_custom_call.1} parent=1 // loop_header
      %s39 = sphi 0, %s43
      %p40 = scmp.ge.s32.totalorder %s39, 4
      %s46 = sphi 0, %s58
      %s47 = sphi 0, %s54
      %s48 = sphi 0, %s46
      %s49 = sphi 0, %s47
      %s50 = sphi 0, %s48
      %s51 = sphi 0, %s49
      %s63 = sphi 0, %s65
      %s66 = sphi 0, %s63
      %s67 = sphi 0, %s66
      %s83 = sphi 0, %s67
      %s99 = sphi 0, %s101
      %s102 = sphi 0, %s99
      %s103 = sphi 0, %s102
      %s119 = sphi 0, %s103
      %s135 = sphi 0, %s137
      %s138 = sphi 0, %s135
      %s139 = sphi 0, %s138
      %s155 = sphi 0, %s139
      %s163 = sphi 0, %s165
      %s166 = sphi 0, %s163
      %s167 = sphi 0, %s166
      %s183 = sphi 0, %s167
      %s199 = sphi 0, %s201
      %s202 = sphi 0, %s199
      %s203 = sphi 0, %s202
      %s219 = sphi 0, %s203
      %s235 = sphi 0, %s237
      %s238 = sphi 0, %s235
      %s239 = sphi 0, %s238
      %s255 = sphi 0, %s239
      %s263 = sphi 0, %s265
      %s266 = sphi 0, %s263
      %s267 = sphi 0, %s266
      %s283 = sphi 0, %s267
      %s299 = sphi 0, %s301
      %s302 = sphi 0, %s299
      %s303 = sphi 0, %s302
      %s319 = sphi 0, %s303
      %s335 = sphi 0, %s337
      %s338 = sphi 0, %s335
      %s339 = sphi 0, %s338
      %s355 = sphi 0, %s339
      %s363 = sphi 0, %s365
      %s366 = sphi 0, %s363
      %s367 = sphi 0, %s366
      %s383 = sphi 0, %s367
      %s391 = sphi 0, %s393
      %s394 = sphi 0, %s391
      %s395 = sphi 0, %s394
      %s411 = sphi 0, %s395
      %s419 = sphi 0, %s421
      %s422 = sphi 0, %s419
      %s423 = sphi 0, %s422
      %s439 = sphi 0, %s423
    $region4: #{tpu_custom_call.1} parent=1 // loop_header_branch
      %42 = sbr.rel (%p40) target = $region8
    $region5: #{tpu_custom_call.1} parent=1 // loop_body
      %s44 = ssub.s32 %s39, 1
      %s45 = ssub.s32 %s39, 2
      %s52 = sadd.s32 1, %s47
      %p53 = scmp.ge.s32.totalorder %s52, 1
      %s54 = scalar_select %p53, 0, %s52
      %s55 = sadd.s32 1, %s46
      %s56 = scalar_select %p53, %s55, %s46
      %p57 = scmp.ge.s32.totalorder %s56, 2
      %s58 = scalar_select %p57, 0, %s56
      %s59 = ssub.s32 %s46, %s58
      %s60 = ssub.s32 %s47, %s54
      %s61 = sor.u32 %s59, %s60
      %p62 = scmp.eq.s32.totalorder %s61, 0
      %s64 = sadd.s32 %s63, 1
      %s65 = scalar_select %p62, %s63, %s64
      %p68 = pneg %p62
      %p69 = scmp.eq.s32.totalorder %s39, 1
      %p70 = por %p68, %p69
      %p71 = scmp.ne.s32.totalorder %s63, %s66
      %p72 = scmp.eq.s32.totalorder %s39, 0
      %p73 = por %p71, %p72
      %p74 = scmp.ne.s32.totalorder %s63, %s66
      %p75 = scmp.eq.s32.totalorder %s44, 1
      %p76 = por %p74, %p75
      %p77 = scmp.ne.s32.totalorder %s66, %s67
      %p78 = scmp.eq.s32.totalorder %s44, 0
      %p79 = por %p77, %p78
      %p80 = scmp.ne.s32.totalorder %s66, %s67
      %p81 = scmp.eq.s32.totalorder %s45, 1
      %p82 = por %p80, %p81
      %p84 = scmp.ne.s32.totalorder %s67, %s83
      %p85 = scmp.eq.s32.totalorder %s45, 0
      %p86 = por %p84, %p85
      %s87 = smul.u32 %s47, 2
      %s88 = ssub.s32 %s87, 1
      %p89 = scmp.gt.s32.totalorder %s88, 0
      %s90 = scalar_select %p89, %s88, 0
      %s91 = smul.u32 %s54, 2
      %s92 = ssub.s32 %s91, 1
      %p93 = scmp.gt.s32.totalorder %s92, 0
      %s94 = scalar_select %p93, %s92, 0
      %s95 = ssub.s32 %s46, %s58
      %s96 = ssub.s32 %s90, %s94
      %s97 = sor.u32 %s95, %s96
      %p98 = scmp.eq.s32.totalorder %s97, 0
      %s100 = sadd.s32 %s99, 1
      %s101 = scalar_select %p98, %s99, %s100
      %p104 = pneg %p98
      %p105 = scmp.eq.s32.totalorder %s39, 1
      %p106 = por %p104, %p105
      %p107 = scmp.ne.s32.totalorder %s99, %s102
      %p108 = scmp.eq.s32.totalorder %s39, 0
      %p109 = por %p107, %p108
      %p110 = scmp.ne.s32.totalorder %s99, %s102
      %p111 = scmp.eq.s32.totalorder %s44, 1
      %p112 = por %p110, %p111
      %p113 = scmp.ne.s32.totalorder %s102, %s103
      %p114 = scmp.eq.s32.totalorder %s44, 0
      %p115 = por %p113, %p114
      %p116 = scmp.ne.s32.totalorder %s102, %s103
      %p117 = scmp.eq.s32.totalorder %s45, 1
      %p118 = por %p116, %p117
      %p120 = scmp.ne.s32.totalorder %s103, %s119
      %p121 = scmp.eq.s32.totalorder %s45, 0
      %p122 = por %p120, %p121
      %s123 = sadd.s32 %s47, 1
      %s124 = smul.u32 %s123, 2
      %p125 = scmp.lt.s32.totalorder %s124, 1
      %s126 = scalar_select %p125, %s124, 1
      %s127 = sadd.s32 %s54, 1
      %s128 = smul.u32 %s127, 2
      %p129 = scmp.lt.s32.totalorder %s128, 1
      %s130 = scalar_select %p129, %s128, 1
      %s131 = ssub.s32 %s46, %s58
      %s132 = ssub.s32 %s126, %s130
      %s133 = sor.u32 %s131, %s132
      %p134 = scmp.eq.s32.totalorder %s133, 0
      %s136 = sadd.s32 %s135, 1
      %s137 = scalar_select %p134, %s135, %s136
      %p140 = pneg %p134
      %p141 = scmp.eq.s32.totalorder %s39, 1
      %p142 = por %p140, %p141
      %p143 = scmp.ne.s32.totalorder %s135, %s138
      %p144 = scmp.eq.s32.totalorder %s39, 0
      %p145 = por %p143, %p144
      %p146 = scmp.ne.s32.totalorder %s135, %s138
      %p147 = scmp.eq.s32.totalorder %s44, 1
      %p148 = por %p146, %p147
      %p149 = scmp.ne.s32.totalorder %s138, %s139
      %p150 = scmp.eq.s32.totalorder %s44, 0
      %p151 = por %p149, %p150
      %p152 = scmp.ne.s32.totalorder %s138, %s139
      %p153 = scmp.eq.s32.totalorder %s45, 1
      %p154 = por %p152, %p153
      %p156 = scmp.ne.s32.totalorder %s139, %s155
      %p157 = scmp.eq.s32.totalorder %s45, 0
      %p158 = por %p156, %p157
      %s159 = ssub.s32 %s46, %s58
      %s160 = ssub.s32 %s47, %s54
      %s161 = sor.u32 %s159, %s160
      %p162 = scmp.eq.s32.totalorder %s161, 0
      %s164 = sadd.s32 %s163, 1
      %s165 = scalar_select %p162, %s163, %s164
      %p168 = pneg %p162
      %p169 = scmp.eq.s32.totalorder %s39, 1
      %p170 = por %p168, %p169
      %p171 = scmp.ne.s32.totalorder %s163, %s166
      %p172 = scmp.eq.s32.totalorder %s39, 0
      %p173 = por %p171, %p172
      %p174 = scmp.ne.s32.totalorder %s163, %s166
      %p175 = scmp.eq.s32.totalorder %s44, 1
      %p176 = por %p174, %p175
      %p177 = scmp.ne.s32.totalorder %s166, %s167
      %p178 = scmp.eq.s32.totalorder %s44, 0
      %p179 = por %p177, %p178
      %p180 = scmp.ne.s32.totalorder %s166, %s167
      %p181 = scmp.eq.s32.totalorder %s45, 1
      %p182 = por %p180, %p181
      %p184 = scmp.ne.s32.totalorder %s167, %s183
      %p185 = scmp.eq.s32.totalorder %s45, 0
      %p186 = por %p184, %p185
      %s187 = smul.u32 %s47, 2
      %s188 = ssub.s32 %s187, 1
      %p189 = scmp.gt.s32.totalorder %s188, 0
      %s190 = scalar_select %p189, %s188, 0
      %s191 = smul.u32 %s54, 2
      %s192 = ssub.s32 %s191, 1
      %p193 = scmp.gt.s32.totalorder %s192, 0
      %s194 = scalar_select %p193, %s192, 0
      %s195 = ssub.s32 %s46, %s58
      %s196 = ssub.s32 %s190, %s194
      %s197 = sor.u32 %s195, %s196
      %p198 = scmp.eq.s32.totalorder %s197, 0
      %s200 = sadd.s32 %s199, 1
      %s201 = scalar_select %p198, %s199, %s200
      %p204 = pneg %p198
      %p205 = scmp.eq.s32.totalorder %s39, 1
      %p206 = por %p204, %p205
      %p207 = scmp.ne.s32.totalorder %s199, %s202
      %p208 = scmp.eq.s32.totalorder %s39, 0
      %p209 = por %p207, %p208
      %p210 = scmp.ne.s32.totalorder %s199, %s202
      %p211 = scmp.eq.s32.totalorder %s44, 1
      %p212 = por %p210, %p211
      %p213 = scmp.ne.s32.totalorder %s202, %s203
      %p214 = scmp.eq.s32.totalorder %s44, 0
      %p215 = por %p213, %p214
      %p216 = scmp.ne.s32.totalorder %s202, %s203
      %p217 = scmp.eq.s32.totalorder %s45, 1
      %p218 = por %p216, %p217
      %p220 = scmp.ne.s32.totalorder %s203, %s219
      %p221 = scmp.eq.s32.totalorder %s45, 0
      %p222 = por %p220, %p221
      %s223 = sadd.s32 %s47, 1
      %s224 = smul.u32 %s223, 2
      %p225 = scmp.lt.s32.totalorder %s224, 1
      %s226 = scalar_select %p225, %s224, 1
      %s227 = sadd.s32 %s54, 1
      %s228 = smul.u32 %s227, 2
      %p229 = scmp.lt.s32.totalorder %s228, 1
      %s230 = scalar_select %p229, %s228, 1
      %s231 = ssub.s32 %s46, %s58
      %s232 = ssub.s32 %s226, %s230
      %s233 = sor.u32 %s231, %s232
      %p234 = scmp.eq.s32.totalorder %s233, 0
      %s236 = sadd.s32 %s235, 1
      %s237 = scalar_select %p234, %s235, %s236
      %p240 = pneg %p234
      %p241 = scmp.eq.s32.totalorder %s39, 1
      %p242 = por %p240, %p241
      %p243 = scmp.ne.s32.totalorder %s235, %s238
      %p244 = scmp.eq.s32.totalorder %s39, 0
      %p245 = por %p243, %p244
      %p246 = scmp.ne.s32.totalorder %s235, %s238
      %p247 = scmp.eq.s32.totalorder %s44, 1
      %p248 = por %p246, %p247
      %p249 = scmp.ne.s32.totalorder %s238, %s239
      %p250 = scmp.eq.s32.totalorder %s44, 0
      %p251 = por %p249, %p250
      %p252 = scmp.ne.s32.totalorder %s238, %s239
      %p253 = scmp.eq.s32.totalorder %s45, 1
      %p254 = por %p252, %p253
      %p256 = scmp.ne.s32.totalorder %s239, %s255
      %p257 = scmp.eq.s32.totalorder %s45, 0
      %p258 = por %p256, %p257
      %s259 = ssub.s32 %s46, %s58
      %s260 = ssub.s32 %s47, %s54
      %s261 = sor.u32 %s259, %s260
      %p262 = scmp.eq.s32.totalorder %s261, 0
      %s264 = sadd.s32 %s263, 1
      %s265 = scalar_select %p262, %s263, %s264
      %p268 = pneg %p262
      %p269 = scmp.eq.s32.totalorder %s39, 1
      %p270 = por %p268, %p269
      %p271 = scmp.ne.s32.totalorder %s263, %s266
      %p272 = scmp.eq.s32.totalorder %s39, 0
      %p273 = por %p271, %p272
      %p274 = scmp.ne.s32.totalorder %s263, %s266
      %p275 = scmp.eq.s32.totalorder %s44, 1
      %p276 = por %p274, %p275
      %p277 = scmp.ne.s32.totalorder %s266, %s267
      %p278 = scmp.eq.s32.totalorder %s44, 0
      %p279 = por %p277, %p278
      %p280 = scmp.ne.s32.totalorder %s266, %s267
      %p281 = scmp.eq.s32.totalorder %s45, 1
      %p282 = por %p280, %p281
      %p284 = scmp.ne.s32.totalorder %s267, %s283
      %p285 = scmp.eq.s32.totalorder %s45, 0
      %p286 = por %p284, %p285
      %s287 = smul.u32 %s47, 2
      %s288 = ssub.s32 %s287, 1
      %p289 = scmp.gt.s32.totalorder %s288, 0
      %s290 = scalar_select %p289, %s288, 0
      %s291 = smul.u32 %s54, 2
      %s292 = ssub.s32 %s291, 1
      %p293 = scmp.gt.s32.totalorder %s292, 0
      %s294 = scalar_select %p293, %s292, 0
      %s295 = ssub.s32 %s46, %s58
      %s296 = ssub.s32 %s290, %s294
      %s297 = sor.u32 %s295, %s296
      %p298 = scmp.eq.s32.totalorder %s297, 0
      %s300 = sadd.s32 %s299, 1
      %s301 = scalar_select %p298, %s299, %s300
      %p304 = pneg %p298
      %p305 = scmp.eq.s32.totalorder %s39, 1
      %p306 = por %p304, %p305
      %p307 = scmp.ne.s32.totalorder %s299, %s302
      %p308 = scmp.eq.s32.totalorder %s39, 0
      %p309 = por %p307, %p308
      %p310 = scmp.ne.s32.totalorder %s299, %s302
      %p311 = scmp.eq.s32.totalorder %s44, 1
      %p312 = por %p310, %p311
      %p313 = scmp.ne.s32.totalorder %s302, %s303
      %p314 = scmp.eq.s32.totalorder %s44, 0
      %p315 = por %p313, %p314
      %p316 = scmp.ne.s32.totalorder %s302, %s303
      %p317 = scmp.eq.s32.totalorder %s45, 1
      %p318 = por %p316, %p317
      %p320 = scmp.ne.s32.totalorder %s303, %s319
      %p321 = scmp.eq.s32.totalorder %s45, 0
      %p322 = por %p320, %p321
      %s323 = sadd.s32 %s47, 1
      %s324 = smul.u32 %s323, 2
      %p325 = scmp.lt.s32.totalorder %s324, 1
      %s326 = scalar_select %p325, %s324, 1
      %s327 = sadd.s32 %s54, 1
      %s328 = smul.u32 %s327, 2
      %p329 = scmp.lt.s32.totalorder %s328, 1
      %s330 = scalar_select %p329, %s328, 1
      %s331 = ssub.s32 %s46, %s58
      %s332 = ssub.s32 %s326, %s330
      %s333 = sor.u32 %s331, %s332
      %p334 = scmp.eq.s32.totalorder %s333, 0
      %s336 = sadd.s32 %s335, 1
      %s337 = scalar_select %p334, %s335, %s336
      %p340 = pneg %p334
      %p341 = scmp.eq.s32.totalorder %s39, 1
      %p342 = por %p340, %p341
      %p343 = scmp.ne.s32.totalorder %s335, %s338
      %p344 = scmp.eq.s32.totalorder %s39, 0
      %p345 = por %p343, %p344
      %p346 = scmp.ne.s32.totalorder %s335, %s338
      %p347 = scmp.eq.s32.totalorder %s44, 1
      %p348 = por %p346, %p347
      %p349 = scmp.ne.s32.totalorder %s338, %s339
      %p350 = scmp.eq.s32.totalorder %s44, 0
      %p351 = por %p349, %p350
      %p352 = scmp.ne.s32.totalorder %s338, %s339
      %p353 = scmp.eq.s32.totalorder %s45, 1
      %p354 = por %p352, %p353
      %p356 = scmp.ne.s32.totalorder %s339, %s355
      %p357 = scmp.eq.s32.totalorder %s45, 0
      %p358 = por %p356, %p357
      %s359 = ssub.s32 %s46, %s58
      %s360 = ssub.s32 %s47, %s54
      %s361 = sor.u32 %s359, %s360
      %p362 = scmp.eq.s32.totalorder %s361, 0
      %s364 = sadd.s32 %s363, 1
      %s365 = scalar_select %p362, %s363, %s364
      %p368 = pneg %p362
      %p369 = scmp.eq.s32.totalorder %s39, 1
      %p370 = por %p368, %p369
      %p371 = scmp.ne.s32.totalorder %s363, %s366
      %p372 = scmp.eq.s32.totalorder %s39, 0
      %p373 = por %p371, %p372
      %p374 = scmp.ne.s32.totalorder %s363, %s366
      %p375 = scmp.eq.s32.totalorder %s44, 1
      %p376 = por %p374, %p375
      %p377 = scmp.ne.s32.totalorder %s366, %s367
      %p378 = scmp.eq.s32.totalorder %s44, 0
      %p379 = por %p377, %p378
      %p380 = scmp.ne.s32.totalorder %s366, %s367
      %p381 = scmp.eq.s32.totalorder %s45, 1
      %p382 = por %p380, %p381
      %p384 = scmp.ne.s32.totalorder %s367, %s383
      %p385 = scmp.eq.s32.totalorder %s45, 0
      %p386 = por %p384, %p385
      %s387 = ssub.s32 %s46, %s58
      %s388 = ssub.s32 %s47, %s54
      %s389 = sor.u32 %s387, %s388
      %p390 = scmp.eq.s32.totalorder %s389, 0
      %s392 = sadd.s32 %s391, 1
      %s393 = scalar_select %p390, %s391, %s392
      %p396 = pneg %p390
      %p397 = scmp.eq.s32.totalorder %s39, 1
      %p398 = por %p396, %p397
      %p399 = scmp.ne.s32.totalorder %s391, %s394
      %p400 = scmp.eq.s32.totalorder %s39, 0
      %p401 = por %p399, %p400
      %p402 = scmp.ne.s32.totalorder %s391, %s394
      %p403 = scmp.eq.s32.totalorder %s44, 1
      %p404 = por %p402, %p403
      %p405 = scmp.ne.s32.totalorder %s394, %s395
      %p406 = scmp.eq.s32.totalorder %s44, 0
      %p407 = por %p405, %p406
      %p408 = scmp.ne.s32.totalorder %s394, %s395
      %p409 = scmp.eq.s32.totalorder %s45, 1
      %p410 = por %p408, %p409
      %p412 = scmp.ne.s32.totalorder %s395, %s411
      %p413 = scmp.eq.s32.totalorder %s45, 0
      %p414 = por %p412, %p413
      %s415 = ssub.s32 %s46, %s58
      %s416 = ssub.s32 %s47, %s54
      %s417 = sor.u32 %s415, %s416
      %p418 = scmp.eq.s32.totalorder %s417, 0
      %s420 = sadd.s32 %s419, 1
      %s421 = scalar_select %p418, %s419, %s420
      %p424 = pneg %p418
      %p425 = scmp.eq.s32.totalorder %s39, 1
      %p426 = por %p424, %p425
      %p427 = scmp.ne.s32.totalorder %s419, %s422
      %p428 = scmp.eq.s32.totalorder %s39, 0
      %p429 = por %p427, %p428
      %p430 = scmp.ne.s32.totalorder %s419, %s422
      %p431 = scmp.eq.s32.totalorder %s44, 1
      %p432 = por %p430, %p431
      %p433 = scmp.ne.s32.totalorder %s422, %s423
      %p434 = scmp.eq.s32.totalorder %s44, 0
      %p435 = por %p433, %p434
      %p436 = scmp.ne.s32.totalorder %s422, %s423
      %p437 = scmp.eq.s32.totalorder %s45, 1
      %p438 = por %p436, %p437
      %p440 = scmp.ne.s32.totalorder %s423, %s439
      %p441 = scmp.eq.s32.totalorder %s45, 0
      %p442 = por %p440, %p441
      %p443 = scmp.le.s32.totalorder 1, %s39
      %p444 = scmp.lt.s32.totalorder %s39, 3
      %p445 = pnand %p443, %p444
      %p446 = pneg %p445
      // Predicated region
      $region9: #{tpu_custom_call.1} parent=5 // pred_check
        _
      $region10: #{tpu_custom_call.1} parent=5 // pred_check_branch
        %448 = sbr.rel (%p445) target = $region12
      $region11: #{tpu_custom_call.1} parent=5 // pred_region
        %s449 = ssub.s32 %s39, 1
      $region12: #{tpu_custom_call.1} parent=5 // pred_fallthru
        _
      %p450 = scmp.lt.s32.totalorder %s39, 2
      // Predicated region
      $region13: #{tpu_custom_call.1} parent=5 // pred_check
        %p451 = pneg %p450
      $region14: #{tpu_custom_call.1} parent=5 // pred_check_branch
        %453 = sbr.rel (%p451) target = $region16
      $region15: #{tpu_custom_call.1} parent=5 // pred_region
        // Predicated region
        $region17: #{tpu_custom_call.1} parent=15 // pred_check
          %p454 = pneg %p73
        $region18: #{tpu_custom_call.1} parent=15 // pred_check_branch
          %456 = sbr.rel (%p454) target = $region20
        $region19: #{tpu_custom_call.1} parent=15 // pred_region
          %s457 = sand.u32 %s63, 1
          %s458 = scalar_lea.sflag [#allocation6], %s457
          %s459 = sand.u32 %s63, 1
          %s460 = smul.addr %s459, 16
          %s461 = scalar_lea.vmem [#allocation5], %s460
          %s462 = smul.u32 2, %s47
          %464 = vsyncadd %s458, 0
          %s465 = smul.addr %s46, 2
          %s466 = sadd.s32 %s462, %s465
          %s467 = smul.addr %s466, 8
          %s468 = scalar_lea.hbm %s0, %s467
          %s469 = sshll.u32 %s468, 4
          %s470 = int_to_ptr.hbm [resolvable:$true] %s469
          %s471 = sshll.u32 %s461, 4
          %s472 = int_to_ptr.vmem [resolvable:$true] %s471
          %477 = dma.hbm_to_vmem [thread:$0]  %s470, 256, %s472, %s458, 128, 128, 8
        $region20: #{tpu_custom_call.1} parent=15 // pred_fallthru
          _
        // Predicated region
        $region21: #{tpu_custom_call.1} parent=15 // pred_check
          %p478 = pneg %p109
        $region22: #{tpu_custom_call.1} parent=15 // pred_check_branch
          %480 = sbr.rel (%p478) target = $region24
        $region23: #{tpu_custom_call.1} parent=15 // pred_region
          %s481 = sand.u32 %s39, 1
          %s482 = scalar_lea.sflag [#allocation9], %s481
          %s483 = sand.u32 %s99, 1
          %s484 = smul.addr %s483, 8
          %s485 = scalar_lea.vmem [#allocation8], %s484
          %s486 = smul.u32 %s47, 2
          %s487 = ssub.s32 %s486, 1
          %p488 = scmp.gt.s32.totalorder %s487, 0
          %s489 = scalar_select %p488, %s487, 0
          %491 = vsyncadd %s482, 0
          %s492 = smul.addr %s46, 2
          %s493 = sadd.s32 %s489, %s492
          %s494 = smul.addr %s493, 8
          %s495 = scalar_lea.hbm %s1, %s494
          %s497 = sshll.u32 %s495, 4
          %s498 = int_to_ptr.hbm [resolvable:$true] %s497
          %s499 = sshll.u32 %s485, 4
          %s500 = int_to_ptr.vmem [resolvable:$true] %s499
          %502 = dma.hbm_to_vmem [thread:$0]  %s498, 128, %s500, %s482
        $region24: #{tpu_custom_call.1} parent=15 // pred_fallthru
          _
        // Predicated region
        $region25: #{tpu_custom_call.1} parent=15 // pred_check
          %p503 = pneg %p145
        $region26: #{tpu_custom_call.1} parent=15 // pred_check_branch
          %505 = sbr.rel (%p503) target = $region28
        $region27: #{tpu_custom_call.1} parent=15 // pred_region
          %s506 = sand.u32 %s39, 1
          %s507 = scalar_lea.sflag [#allocation9], %s506
          %s508 = sand.u32 %s135, 1
          %s509 = smul.addr %s508, 8
          %s510 = scalar_lea.vmem [#allocation10], %s509
          %s511 = sadd.s32 %s47, 1
          %s512 = smul.u32 %s511, 2
          %p513 = scmp.lt.s32.totalorder %s512, 1
          %s514 = scalar_select %p513, %s512, 1
          %516 = vsyncadd %s507, 0
          %s517 = smul.addr %s46, 2
          %s518 = sadd.s32 %s514, %s517
          %s519 = smul.addr %s518, 8
          %s520 = scalar_lea.hbm %s2, %s519
          %s522 = sshll.u32 %s520, 4
          %s523 = int_to_ptr.hbm [resolvable:$true] %s522
          %s524 = sshll.u32 %s510, 4
          %s525 = int_to_ptr.vmem [resolvable:$true] %s524
          %527 = dma.hbm_to_vmem [thread:$0]  %s523, 128, %s525, %s507
        $region28: #{tpu_custom_call.1} parent=15 // pred_fallthru
          _
        // Predicated region
        $region29: #{tpu_custom_call.1} parent=15 // pred_check
          %p528 = pneg %p173
        $region30: #{tpu_custom_call.1} parent=15 // pred_check_branch
          %530 = sbr.rel (%p528) target = $region32
        $region31: #{tpu_custom_call.1} parent=15 // pred_region
          %s531 = sand.u32 %s39, 1
          %s532 = scalar_lea.sflag [#allocation12], %s531
          %s533 = sand.u32 %s163, 1
          %s534 = smul.addr %s533, 16
          %s535 = scalar_lea.vmem [#allocation11], %s534
          %s536 = smul.u32 2, %s47
          %538 = vsyncadd %s532, 0
          %s539 = smul.addr %s46, 2
          %s540 = sadd.s32 %s536, %s539
          %s541 = smul.addr %s540, 8
          %s542 = scalar_lea.hbm %s3, %s541
          %s543 = sshll.u32 %s542, 4
          %s544 = int_to_ptr.hbm [resolvable:$true] %s543
          %s545 = sshll.u32 %s535, 4
          %s546 = int_to_ptr.vmem [resolvable:$true] %s545
          %551 = dma.hbm_to_vmem [thread:$0]  %s544, 256, %s546, %s532, 128, 128, 8
        $region32: #{tpu_custom_call.1} parent=15 // pred_fallthru
          _
        // Predicated region
        $region33: #{tpu_custom_call.1} parent=15 // pred_check
          %p552 = pneg %p209
        $region34: #{tpu_custom_call.1} parent=15 // pred_check_branch
          %554 = sbr.rel (%p552) target = $region36
        $region35: #{tpu_custom_call.1} parent=15 // pred_region
          %s555 = sand.u32 %s39, 1
          %s556 = scalar_lea.sflag [#allocation12], %s555
          %s557 = sand.u32 %s199, 1
          %s558 = smul.addr %s557, 8
          %s559 = scalar_lea.vmem [#allocation13], %s558
          %s560 = smul.u32 %s47, 2
          %s561 = ssub.s32 %s560, 1
          %p562 = scmp.gt.s32.totalorder %s561, 0
          %s563 = scalar_select %p562, %s561, 0
          %565 = vsyncadd %s556, 0
          %s566 = smul.addr %s46, 2
          %s567 = sadd.s32 %s563, %s566
          %s568 = smul.addr %s567, 8
          %s569 = scalar_lea.hbm %s4, %s568
          %s571 = sshll.u32 %s569, 4
          %s572 = int_to_ptr.hbm [resolvable:$true] %s571
          %s573 = sshll.u32 %s559, 4
          %s574 = int_to_ptr.vmem [resolvable:$true] %s573
          %576 = dma.hbm_to_vmem [thread:$0]  %s572, 128, %s574, %s556
        $region36: #{tpu_custom_call.1} parent=15 // pred_fallthru
          _
        // Predicated region
        $region37: #{tpu_custom_call.1} parent=15 // pred_check
          %p577 = pneg %p245
        $region38: #{tpu_custom_call.1} parent=15 // pred_check_branch
          %579 = sbr.rel (%p577) target = $region40
        $region39: #{tpu_custom_call.1} parent=15 // pred_region
          %s580 = sand.u32 %s39, 1
          %s581 = scalar_lea.sflag [#allocation15], %s580
          %s582 = sand.u32 %s235, 1
          %s583 = smul.addr %s582, 8
          %s584 = scalar_lea.vmem [#allocation14], %s583
          %s585 = sadd.s32 %s47, 1
          %s586 = smul.u32 %s585, 2
          %p587 = scmp.lt.s32.totalorder %s586, 1
          %s588 = scalar_select %p587, %s586, 1
          %590 = vsyncadd %s581, 0
          %s591 = smul.addr %s46, 2
          %s592 = sadd.s32 %s588, %s591
          %s593 = smul.addr %s592, 8
          %s594 = scalar_lea.hbm %s5, %s593
          %s596 = sshll.u32 %s594, 4
          %s597 = int_to_ptr.hbm [resolvable:$true] %s596
          %s598 = sshll.u32 %s584, 4
          %s599 = int_to_ptr.vmem [resolvable:$true] %s598
          %601 = dma.hbm_to_vmem [thread:$0]  %s597, 128, %s599, %s581
        $region40: #{tpu_custom_call.1} parent=15 // pred_fallthru
          _
        // Predicated region
        $region41: #{tpu_custom_call.1} parent=15 // pred_check
          %p602 = pneg %p273
        $region42: #{tpu_custom_call.1} parent=15 // pred_check_branch
          %604 = sbr.rel (%p602) target = $region44
        $region43: #{tpu_custom_call.1} parent=15 // pred_region
          %s605 = sand.u32 %s39, 1
          %s606 = scalar_lea.sflag [#allocation15], %s605
          %s607 = sand.u32 %s263, 1
          %s608 = smul.addr %s607, 16
          %s609 = scalar_lea.vmem [#allocation16], %s608
          %s610 = smul.u32 2, %s47
          %612 = vsyncadd %s606, 0
          %s613 = smul.addr %s46, 2
          %s614 = sadd.s32 %s610, %s613
          %s615 = smul.addr %s614, 8
          %s616 = scalar_lea.hbm %s6, %s615
          %s617 = sshll.u32 %s616, 4
          %s618 = int_to_ptr.hbm [resolvable:$true] %s617
          %s619 = sshll.u32 %s609, 4
          %s620 = int_to_ptr.vmem [resolvable:$true] %s619
          %625 = dma.hbm_to_vmem [thread:$0]  %s618, 256, %s620, %s606, 128, 128, 8
        $region44: #{tpu_custom_call.1} parent=15 // pred_fallthru
          _
        // Predicated region
        $region45: #{tpu_custom_call.1} parent=15 // pred_check
          %p626 = pneg %p309
        $region46: #{tpu_custom_call.1} parent=15 // pred_check_branch
          %628 = sbr.rel (%p626) target = $region48
        $region47: #{tpu_custom_call.1} parent=15 // pred_region
          %s629 = sand.u32 %s39, 1
          %s630 = scalar_lea.sflag [#allocation18], %s629
          %s631 = sand.u32 %s299, 1
          %s632 = smul.addr %s631, 8
          %s633 = scalar_lea.vmem [#allocation17], %s632
          %s634 = smul.u32 %s47, 2
          %s635 = ssub.s32 %s634, 1
          %p636 = scmp.gt.s32.totalorder %s635, 0
          %s637 = scalar_select %p636, %s635, 0
          %639 = vsyncadd %s630, 0
          %s640 = smul.addr %s46, 2
          %s641 = sadd.s32 %s637, %s640
          %s642 = smul.addr %s641, 8
          %s643 = scalar_lea.hbm %s7, %s642
          %s645 = sshll.u32 %s643, 4
          %s646 = int_to_ptr.hbm [resolvable:$true] %s645
          %s647 = sshll.u32 %s633, 4
          %s648 = int_to_ptr.vmem [resolvable:$true] %s647
          %650 = dma.hbm_to_vmem [thread:$0]  %s646, 128, %s648, %s630
        $region48: #{tpu_custom_call.1} parent=15 // pred_fallthru
          _
        // Predicated region
        $region49: #{tpu_custom_call.1} parent=15 // pred_check
          %p651 = pneg %p345
        $region50: #{tpu_custom_call.1} parent=15 // pred_check_branch
          %653 = sbr.rel (%p651) target = $region52
        $region51: #{tpu_custom_call.1} parent=15 // pred_region
          %s654 = sand.u32 %s39, 1
          %s655 = scalar_lea.sflag [#allocation18], %s654
          %s656 = sand.u32 %s335, 1
          %s657 = smul.addr %s656, 8
          %s658 = scalar_lea.vmem [#allocation19], %s657
          %s659 = sadd.s32 %s47, 1
          %s660 = smul.u32 %s659, 2
          %p661 = scmp.lt.s32.totalorder %s660, 1
          %s662 = scalar_select %p661, %s660, 1
          %664 = vsyncadd %s655, 0
          %s665 = smul.addr %s46, 2
          %s666 = sadd.s32 %s662, %s665
          %s667 = smul.addr %s666, 8
          %s668 = scalar_lea.hbm %s8, %s667
          %s670 = sshll.u32 %s668, 4
          %s671 = int_to_ptr.hbm [resolvable:$true] %s670
          %s672 = sshll.u32 %s658, 4
          %s673 = int_to_ptr.vmem [resolvable:$true] %s672
          %675 = dma.hbm_to_vmem [thread:$0]  %s671, 128, %s673, %s655
        $region52: #{tpu_custom_call.1} parent=15 // pred_fallthru
          _
      $region16: #{tpu_custom_call.1} parent=5 // pred_fallthru
        _
      %p676 = scmp.le.s32.totalorder 1, %s39
      %p677 = scmp.lt.s32.totalorder %s39, 3
      %p678 = pnand %p676, %p677
      %p679 = pneg %p678
      // Predicated region
      $region53: #{tpu_custom_call.1} parent=5 // pred_check
        _
      $region54: #{tpu_custom_call.1} parent=5 // pred_check_branch
        %681 = sbr.rel (%p678) target = $region56
      $region55: #{tpu_custom_call.1} parent=5 // pred_region
        %s682 = ssub.s32 %s39, 1
        %s683 = sand.u32 %s66, 1
        %s684 = scalar_lea.sflag [#allocation6], %s683
        %s685 = sand.u32 %s66, 1
        %s686 = smul.addr %s685, 16
        %s687 = scalar_lea.vmem [#allocation5], %s686
        // Predicated region
        $region57: #{tpu_custom_call.1} parent=55 // pred_check
          %p688 = pneg %p79
        $region58: #{tpu_custom_call.1} parent=55 // pred_check_branch
          %690 = sbr.rel (%p688) target = $region60
        $region59: #{tpu_custom_call.1} parent=55 // pred_region
          %692 = dma.done %s684, 256
        $region60: #{tpu_custom_call.1} parent=55 // pred_fallthru
          _
        %s693 = sand.u32 %s44, 1
        %s694 = scalar_lea.sflag [#allocation9], %s693
        %s695 = sand.u32 %s102, 1
        %s696 = smul.addr %s695, 8
        %s697 = scalar_lea.vmem [#allocation8], %s696
        // Predicated region
        $region61: #{tpu_custom_call.1} parent=55 // pred_check
          %p698 = pneg %p115
        $region62: #{tpu_custom_call.1} parent=55 // pred_check_branch
          %700 = sbr.rel (%p698) target = $region64
        $region63: #{tpu_custom_call.1} parent=55 // pred_region
          %702 = dma.done %s694, 128
        $region64: #{tpu_custom_call.1} parent=55 // pred_fallthru
          _
        %s703 = sand.u32 %s44, 1
        %s704 = scalar_lea.sflag [#allocation9], %s703
        %s705 = sand.u32 %s138, 1
        %s706 = smul.addr %s705, 8
        %s707 = scalar_lea.vmem [#allocation10], %s706
        // Predicated region
        $region65: #{tpu_custom_call.1} parent=55 // pred_check
          %p708 = pneg %p151
        $region66: #{tpu_custom_call.1} parent=55 // pred_check_branch
          %710 = sbr.rel (%p708) target = $region68
        $region67: #{tpu_custom_call.1} parent=55 // pred_region
          %712 = dma.done %s704, 128
        $region68: #{tpu_custom_call.1} parent=55 // pred_fallthru
          _
        %s713 = sand.u32 %s44, 1
        %s714 = scalar_lea.sflag [#allocation12], %s713
        %s715 = sand.u32 %s166, 1
        %s716 = smul.addr %s715, 16
        %s717 = scalar_lea.vmem [#allocation11], %s716
        // Predicated region
        $region69: #{tpu_custom_call.1} parent=55 // pred_check
          %p718 = pneg %p179
        $region70: #{tpu_custom_call.1} parent=55 // pred_check_branch
          %720 = sbr.rel (%p718) target = $region72
        $region71: #{tpu_custom_call.1} parent=55 // pred_region
          %722 = dma.done %s714, 256
        $region72: #{tpu_custom_call.1} parent=55 // pred_fallthru
          _
        %s723 = sand.u32 %s44, 1
        %s724 = scalar_lea.sflag [#allocation12], %s723
        %s725 = sand.u32 %s202, 1
        %s726 = smul.addr %s725, 8
        %s727 = scalar_lea.vmem [#allocation13], %s726
        // Predicated region
        $region73: #{tpu_custom_call.1} parent=55 // pred_check
          %p728 = pneg %p215
        $region74: #{tpu_custom_call.1} parent=55 // pred_check_branch
          %730 = sbr.rel (%p728) target = $region76
        $region75: #{tpu_custom_call.1} parent=55 // pred_region
          %732 = dma.done %s724, 128
        $region76: #{tpu_custom_call.1} parent=55 // pred_fallthru
          _
        %s733 = sand.u32 %s44, 1
        %s734 = scalar_lea.sflag [#allocation15], %s733
        %s735 = sand.u32 %s238, 1
        %s736 = smul.addr %s735, 8
        %s737 = scalar_lea.vmem [#allocation14], %s736
        // Predicated region
        $region77: #{tpu_custom_call.1} parent=55 // pred_check
          %p738 = pneg %p251
        $region78: #{tpu_custom_call.1} parent=55 // pred_check_branch
          %740 = sbr.rel (%p738) target = $region80
        $region79: #{tpu_custom_call.1} parent=55 // pred_region
          %742 = dma.done %s734, 128
        $region80: #{tpu_custom_call.1} parent=55 // pred_fallthru
          _
        %s743 = sand.u32 %s44, 1
        %s744 = scalar_lea.sflag [#allocation15], %s743
        %s745 = sand.u32 %s266, 1
        %s746 = smul.addr %s745, 16
        %s747 = scalar_lea.vmem [#allocation16], %s746
        // Predicated region
        $region81: #{tpu_custom_call.1} parent=55 // pred_check
          %p748 = pneg %p279
        $region82: #{tpu_custom_call.1} parent=55 // pred_check_branch
          %750 = sbr.rel (%p748) target = $region84
        $region83: #{tpu_custom_call.1} parent=55 // pred_region
          %752 = dma.done %s744, 256
        $region84: #{tpu_custom_call.1} parent=55 // pred_fallthru
          _
        %s753 = sand.u32 %s44, 1
        %s754 = scalar_lea.sflag [#allocation18], %s753
        %s755 = sand.u32 %s302, 1
        %s756 = smul.addr %s755, 8
        %s757 = scalar_lea.vmem [#allocation17], %s756
        // Predicated region
        $region85: #{tpu_custom_call.1} parent=55 // pred_check
          %p758 = pneg %p315
        $region86: #{tpu_custom_call.1} parent=55 // pred_check_branch
          %760 = sbr.rel (%p758) target = $region88
        $region87: #{tpu_custom_call.1} parent=55 // pred_region
          %762 = dma.done %s754, 128
        $region88: #{tpu_custom_call.1} parent=55 // pred_fallthru
          _
        %s763 = sand.u32 %s44, 1
        %s764 = scalar_lea.sflag [#allocation18], %s763
        %s765 = sand.u32 %s338, 1
        %s766 = smul.addr %s765, 8
        %s767 = scalar_lea.vmem [#allocation19], %s766
        // Predicated region
        $region89: #{tpu_custom_call.1} parent=55 // pred_check
          %p768 = pneg %p351
        $region90: #{tpu_custom_call.1} parent=55 // pred_check_branch
          %770 = sbr.rel (%p768) target = $region92
        $region91: #{tpu_custom_call.1} parent=55 // pred_region
          %772 = dma.done %s764, 128
        $region92: #{tpu_custom_call.1} parent=55 // pred_fallthru
          _
        %s773 = sand.u32 %s66, 1
        %s774 = scalar_lea.sflag [#allocation6], %s773
        %s775 = sand.u32 %s66, 1
        %s776 = smul.addr %s775, 16
        %s777 = scalar_lea.vmem [#allocation5], %s776
        %p778 = pneg %p79
        %p779 = pneg %p76
        %s780 = sand.u32 %s44, 1
        %s781 = scalar_lea.sflag [#allocation9], %s780
        %s782 = sand.u32 %s102, 1
        %s783 = smul.addr %s782, 8
        %s784 = scalar_lea.vmem [#allocation8], %s783
        %p785 = pneg %p115
        %p786 = pneg %p112
        %s787 = sand.u32 %s44, 1
        %s788 = scalar_lea.sflag [#allocation9], %s787
        %s789 = sand.u32 %s138, 1
        %s790 = smul.addr %s789, 8
        %s791 = scalar_lea.vmem [#allocation10], %s790
        %p792 = pneg %p151
        %p793 = pneg %p148
        %s794 = sand.u32 %s44, 1
        %s795 = scalar_lea.sflag [#allocation12], %s794
        %s796 = sand.u32 %s166, 1
        %s797 = smul.addr %s796, 16
        %s798 = scalar_lea.vmem [#allocation11], %s797
        %p799 = pneg %p179
        %p800 = pneg %p176
        %s801 = sand.u32 %s44, 1
        %s802 = scalar_lea.sflag [#allocation12], %s801
        %s803 = sand.u32 %s202, 1
        %s804 = smul.addr %s803, 8
        %s805 = scalar_lea.vmem [#allocation13], %s804
        %p806 = pneg %p215
        %p807 = pneg %p212
        %s808 = sand.u32 %s44, 1
        %s809 = scalar_lea.sflag [#allocation15], %s808
        %s810 = sand.u32 %s238, 1
        %s811 = smul.addr %s810, 8
        %s812 = scalar_lea.vmem [#allocation14], %s811
        %p813 = pneg %p251
        %p814 = pneg %p248
        %s815 = sand.u32 %s44, 1
        %s816 = scalar_lea.sflag [#allocation15], %s815
        %s817 = sand.u32 %s266, 1
        %s818 = smul.addr %s817, 16
        %s819 = scalar_lea.vmem [#allocation16], %s818
        %p820 = pneg %p279
        %p821 = pneg %p276
        %s822 = sand.u32 %s44, 1
        %s823 = scalar_lea.sflag [#allocation18], %s822
        %s824 = sand.u32 %s302, 1
        %s825 = smul.addr %s824, 8
        %s826 = scalar_lea.vmem [#allocation17], %s825
        %p827 = pneg %p315
        %p828 = pneg %p312
        %s829 = sand.u32 %s44, 1
        %s830 = scalar_lea.sflag [#allocation18], %s829
        %s831 = sand.u32 %s338, 1
        %s832 = smul.addr %s831, 8
        %s833 = scalar_lea.vmem [#allocation19], %s832
        %p834 = pneg %p351
        %p835 = pneg %p348
        %p836 = pneg %p379
        %p837 = pneg %p376
        %s838 = sand.u32 %s366, 1
        %s839 = scalar_lea.sflag [#allocation7], %s838
        %s840 = sand.u32 %s366, 1
        %s841 = smul.addr %s840, 8
        %s842 = scalar_lea.vmem [#allocation20], %s841
        %p843 = pneg %p407
        %p844 = pneg %p404
        %s845 = sand.u32 %s44, 1
        %s846 = scalar_lea.sflag [#allocation22], %s845
        %s847 = sand.u32 %s394, 1
        %s848 = smul.addr %s847, 8
        %s849 = scalar_lea.vmem [#allocation21], %s848
        %p850 = pneg %p435
        %p851 = pneg %p432
        %s852 = sand.u32 %s44, 1
        %s853 = scalar_lea.sflag [#allocation22], %s852
        %s854 = sand.u32 %s422, 1
        %s855 = smul.addr %s854, 8
        %s856 = scalar_lea.vmem [#allocation23], %s855
        %s857 = smul.u32 2, %s49
        %s858 = smul.u32 %s49, 2
        %s859 = ssub.s32 %s858, 1
        %p860 = scmp.gt.s32.totalorder %s859, 0
        %s861 = scalar_select %p860, %s859, 0
        %s862 = sadd.s32 %s49, 1
        %s863 = smul.u32 %s862, 2
        %p864 = scmp.lt.s32.totalorder %s863, 1
        %s865 = scalar_select %p864, %s863, 1
        %s866 = smul.u32 2, %s49
        %s867 = smul.u32 %s49, 2
        %s868 = ssub.s32 %s867, 1
        %p869 = scmp.gt.s32.totalorder %s868, 0
        %s870 = scalar_select %p869, %s868, 0
        %s871 = sadd.s32 %s49, 1
        %s872 = smul.u32 %s871, 2
        %p873 = scmp.lt.s32.totalorder %s872, 1
        %s874 = scalar_select %p873, %s872, 1
        %s875 = smul.u32 2, %s49
        %s876 = smul.u32 %s49, 2
        %s877 = ssub.s32 %s876, 1
        %p878 = scmp.gt.s32.totalorder %s877, 0
        %s879 = scalar_select %p878, %s877, 0
        %s880 = sadd.s32 %s49, 1
        %s881 = smul.u32 %s880, 2
        %p882 = scmp.lt.s32.totalorder %s881, 1
        %s883 = scalar_select %p882, %s881, 1
        %s884 = smul.u32 2, %s49
        %s885 = smul.u32 2, %s49
        %p886 = scmp.eq.s32.totalorder %s49, 0
        %s887 = scalar_select %p886, 0.0, 1.0
        %v888 = vld [vmem:[%s697] sm:$0xff]
        %v889 = vstv %s887
        %v890 = vmul.f32 %v888, %v889
        %891 = vst [vmem:[#allocation2] sm:$0xff] %v890
        %v892 = vld [vmem:[%s687] sm:$0xff]
        %v893 = vld [vmem:[%s687 + $0x8] sm:$0xff]
        %894 = vst [vmem:[#allocation2 + $0x8] sm:$0xff] %v892
        %895 = vst [vmem:[#allocation2 + $0x10] sm:$0xff] %v893
        %v896 = vld [vmem:[%s707] sm:$0xff]
        %v897 = vmul.f32 %v896, %v889
        %898 = vst [vmem:[#allocation2 + $0x18] sm:$0xff] %v897
        %v899 = vld [vmem:[%s727] sm:$0xff]
        %v900 = vmul.f32 %v899, %v889
        %901 = vst [vmem:[#allocation3] sm:$0xff] %v900
        %v902 = vld [vmem:[%s717] sm:$0xff]
        %v903 = vld [vmem:[%s717 + $0x8] sm:$0xff]
        %904 = vst [vmem:[#allocation3 + $0x8] sm:$0xff] %v902
        %905 = vst [vmem:[#allocation3 + $0x10] sm:$0xff] %v903
        %v906 = vld [vmem:[%s737] sm:$0xff]
        %v907 = vmul.f32 %v906, %v889
        %908 = vst [vmem:[#allocation3 + $0x18] sm:$0xff] %v907
        %v909 = vld [vmem:[%s757] sm:$0xff]
        %v910 = vmul.f32 %v909, %v889
        %911 = vst [vmem:[#allocation4] sm:$0xff] %v910
        %v912 = vld [vmem:[%s747] sm:$0xff]
        %v913 = vld [vmem:[%s747 + $0x8] sm:$0xff]
        %914 = vst [vmem:[#allocation4 + $0x8] sm:$0xff] %v912
        %915 = vst [vmem:[#allocation4 + $0x10] sm:$0xff] %v913
        %v916 = vld [vmem:[%s767] sm:$0xff]
        %v917 = vmul.f32 %v916, %v889
        %918 = vst [vmem:[#allocation4 + $0x18] sm:$0xff] %v917
        %v919 = vld [vmem:[#allocation2] sm:$0xff]
        %v920 = vld [vmem:[#allocation2 + $0x8] sm:$0xff]
        %v921 = vld [vmem:[#allocation2 + $0x10] sm:$0xff]
        %v922 = vld [vmem:[#allocation2 + $0x18] sm:$0xff]
        %v923 = vld [vmem:[#allocation3] sm:$0xff]
        %v924 = vld [vmem:[#allocation3 + $0x8] sm:$0xff]
        %v925 = vld [vmem:[#allocation3 + $0x10] sm:$0xff]
        %v926 = vld [vmem:[#allocation3 + $0x18] sm:$0xff]
        %v927 = vld [vmem:[#allocation4] sm:$0xff]
        %v928 = vld [vmem:[#allocation4 + $0x8] sm:$0xff]
        %v929 = vld [vmem:[#allocation4 + $0x10] sm:$0xff]
        %v930 = vld [vmem:[#allocation4 + $0x18] sm:$0xff]
        %v931 = vlaneseq
        %v932 = vand.u32 %v931, 127
        %v933 = vrot.slane %v919, 7
        %v934 = vrot.slane %v920, 7
        %v935 = vrot.slane %v921, 7
        %v936 = vlaneseq
        %v937 = vshrl.u32 %v936, 7
        %vm938 = vcmp.lt.s32.totalorder %v937, 1
        %v939 = vsel %vm938, %v934, %v935
        %v940 = vsel %vm938, %v933, %v934
        %v941 = vrot.slane %v920, 1
        %v942 = vrot.slane %v921, 1
        %v943 = vrot.slane %v922, 1
        %vm944 = vcmp.lt.s32.totalorder %v937, 7
        %v945 = vsel %vm944, %v942, %v943
        %v946 = vsel %vm944, %v941, %v942
        %v947 = vadd.f32 %v940, %v946
        %v948 = vadd.f32 %v939, %v945
        %949 = vrot.lane.b32.xlu0 %v920, 1
        %v950 = vpop.permute.xlu0 %949
        %951 = vrot.lane.b32.xlu0 %v921, 1
        %v952 = vpop.permute.xlu0 %951
        %953 = vrot.lane.b32.xlu0 %v920, 127
        %v954 = vpop.permute.xlu0 %953
        %955 = vrot.lane.b32.xlu0 %v921, 127
        %v956 = vpop.permute.xlu0 %955
        %v957 = vadd.f32 %v950, %v954
        %v958 = vadd.f32 %v952, %v956
        %v959 = vadd.f32 %v947, %v957
        %v960 = vadd.f32 %v948, %v958
        %v961 = vmul.f32 %v920, 4.0
        %v962 = vmul.f32 %v921, 4.0
        %v963 = vsub.f32 %v959, %v961
        %v964 = vsub.f32 %v960, %v962
        %v965 = vrot.slane %v923, 7
        %v966 = vrot.slane %v924, 7
        %v967 = vrot.slane %v925, 7
        %v968 = vrot.slane %v926, 7
        %v969 = vsel %vm938, %v967, %v968
        %v970 = vsel %vm938, %v966, %v967
        %v971 = vsel %vm938, %v965, %v966
        %v972 = vsel %vm938, %v968, %v965
        %v973 = vrot.slane %v923, 1
        %v974 = vrot.slane %v924, 1
        %v975 = vrot.slane %v925, 1
        %v976 = vrot.slane %v926, 1
        %v977 = vsel %vm944, %v975, %v976
        %v978 = vsel %vm944, %v974, %v975
        %v979 = vsel %vm944, %v973, %v974
        %v980 = vsel %vm944, %v976, %v973
        %v981 = vadd.f32 %v972, %v979
        %v982 = vadd.f32 %v971, %v978
        %v983 = vadd.f32 %v970, %v977
        %v984 = vadd.f32 %v969, %v980
        %985 = vrot.lane.b32.xlu0 %v923, 1
        %v986 = vpop.permute.xlu0 %985
        %987 = vrot.lane.b32.xlu0 %v924, 1
        %v988 = vpop.permute.xlu0 %987
        %989 = vrot.lane.b32.xlu0 %v925, 1
        %v990 = vpop.permute.xlu0 %989
        %991 = vrot.lane.b32.xlu0 %v926, 1
        %v992 = vpop.permute.xlu0 %991
        %993 = vrot.lane.b32.xlu0 %v923, 127
        %v994 = vpop.permute.xlu0 %993
        %995 = vrot.lane.b32.xlu0 %v924, 127
        %v996 = vpop.permute.xlu0 %995
        %997 = vrot.lane.b32.xlu0 %v925, 127
        %v998 = vpop.permute.xlu0 %997
        %999 = vrot.lane.b32.xlu0 %v926, 127
        %v1000 = vpop.permute.xlu0 %999
        %v1001 = vadd.f32 %v986, %v994
        %v1002 = vadd.f32 %v988, %v996
        %v1003 = vadd.f32 %v990, %v998
        %v1004 = vadd.f32 %v992, %v1000
        %v1005 = vadd.f32 %v981, %v1001
        %v1006 = vadd.f32 %v982, %v1002
        %v1007 = vadd.f32 %v983, %v1003
        %v1008 = vadd.f32 %v984, %v1004
        %v1009 = vmul.f32 %v924, 4.0
        %v1010 = vmul.f32 %v925, 4.0
        %v1011 = vsub.f32 %v1006, %v1009
        %v1012 = vsub.f32 %v1007, %v1010
        %v1013 = vrot.slane %v927, 7
        %v1014 = vrot.slane %v928, 7
        %v1015 = vrot.slane %v929, 7
        %v1016 = vrot.slane %v930, 7
        %v1017 = vsel %vm938, %v1015, %v1016
        %v1018 = vsel %vm938, %v1014, %v1015
        %v1019 = vsel %vm938, %v1013, %v1014
        %v1020 = vsel %vm938, %v1016, %v1013
        %v1021 = vrot.slane %v927, 1
        %v1022 = vrot.slane %v928, 1
        %v1023 = vrot.slane %v929, 1
        %v1024 = vrot.slane %v930, 1
        %v1025 = vsel %vm944, %v1023, %v1024
        %v1026 = vsel %vm944, %v1022, %v1023
        %v1027 = vsel %vm944, %v1021, %v1022
        %v1028 = vsel %vm944, %v1024, %v1021
        %v1029 = vadd.f32 %v1020, %v1027
        %v1030 = vadd.f32 %v1019, %v1026
        %v1031 = vadd.f32 %v1018, %v1025
        %v1032 = vadd.f32 %v1017, %v1028
        %1033 = vrot.lane.b32.xlu0 %v927, 1
        %v1034 = vpop.permute.xlu0 %1033
        %1035 = vrot.lane.b32.xlu0 %v928, 1
        %v1036 = vpop.permute.xlu0 %1035
        %1037 = vrot.lane.b32.xlu0 %v929, 1
        %v1038 = vpop.permute.xlu0 %1037
        %1039 = vrot.lane.b32.xlu0 %v930, 1
        %v1040 = vpop.permute.xlu0 %1039
        %1041 = vrot.lane.b32.xlu0 %v927, 127
        %v1042 = vpop.permute.xlu0 %1041
        %1043 = vrot.lane.b32.xlu0 %v928, 127
        %v1044 = vpop.permute.xlu0 %1043
        %1045 = vrot.lane.b32.xlu0 %v929, 127
        %v1046 = vpop.permute.xlu0 %1045
        %1047 = vrot.lane.b32.xlu0 %v930, 127
        %v1048 = vpop.permute.xlu0 %1047
        %v1049 = vadd.f32 %v1034, %v1042
        %v1050 = vadd.f32 %v1036, %v1044
        %v1051 = vadd.f32 %v1038, %v1046
        %v1052 = vadd.f32 %v1040, %v1048
        %v1053 = vadd.f32 %v1029, %v1049
        %v1054 = vadd.f32 %v1030, %v1050
        %v1055 = vadd.f32 %v1031, %v1051
        %v1056 = vadd.f32 %v1032, %v1052
        %v1057 = vmul.f32 %v928, 4.0
        %v1058 = vmul.f32 %v929, 4.0
        %v1059 = vsub.f32 %v1054, %v1057
        %v1060 = vsub.f32 %v1055, %v1058
        %1061 = vrot.lane.b32.xlu0 %v981, 1
        %v1062 = vpop.permute.xlu0 %1061
        %1063 = vrot.lane.b32.xlu0 %v982, 1
        %v1064 = vpop.permute.xlu0 %1063
        %1065 = vrot.lane.b32.xlu0 %v983, 1
        %v1066 = vpop.permute.xlu0 %1065
        %1067 = vrot.lane.b32.xlu0 %v984, 1
        %v1068 = vpop.permute.xlu0 %1067
        %1069 = vrot.lane.b32.xlu0 %v981, 127
        %v1070 = vpop.permute.xlu0 %1069
        %1071 = vrot.lane.b32.xlu0 %v982, 127
        %v1072 = vpop.permute.xlu0 %1071
        %1073 = vrot.lane.b32.xlu0 %v983, 127
        %v1074 = vpop.permute.xlu0 %1073
        %1075 = vrot.lane.b32.xlu0 %v984, 127
        %v1076 = vpop.permute.xlu0 %1075
        %v1077 = vadd.f32 %v1062, %v1070
        %v1078 = vadd.f32 %v1064, %v1072
        %v1079 = vadd.f32 %v1066, %v1074
        %v1080 = vadd.f32 %v1068, %v1076
        %v1081 = vmul.f32 %v923, 0.1478
        %v1082 = vmul.f32 %v924, 0.1478
        %v1083 = vmul.f32 %v925, 0.1478
        %v1084 = vmul.f32 %v926, 0.1478
        %v1085 = vmul.f32 %v1005, 0.1183
        %v1086 = vmul.f32 %v1006, 0.1183
        %v1087 = vmul.f32 %v1007, 0.1183
        %v1088 = vmul.f32 %v1008, 0.1183
        %v1089 = vadd.f32 %v1081, %v1085
        %v1090 = vadd.f32 %v1082, %v1086
        %v1091 = vadd.f32 %v1083, %v1087
        %v1092 = vadd.f32 %v1084, %v1088
        %v1093 = vmul.f32 %v1077, 0.0947
        %v1094 = vmul.f32 %v1078, 0.0947
        %v1095 = vmul.f32 %v1079, 0.0947
        %v1096 = vmul.f32 %v1080, 0.0947
        %v1097 = vadd.f32 %v1089, %v1093
        %v1098 = vadd.f32 %v1090, %v1094
        %v1099 = vadd.f32 %v1091, %v1095
        %v1100 = vadd.f32 %v1092, %v1096
        %1101 = vrot.lane.b32.xlu0 %v1029, 1
        %v1102 = vpop.permute.xlu0 %1101
        %1103 = vrot.lane.b32.xlu0 %v1030, 1
        %v1104 = vpop.permute.xlu0 %1103
        %1105 = vrot.lane.b32.xlu0 %v1031, 1
        %v1106 = vpop.permute.xlu0 %1105
        %1107 = vrot.lane.b32.xlu0 %v1032, 1
        %v1108 = vpop.permute.xlu0 %1107
        %1109 = vrot.lane.b32.xlu0 %v1029, 127
        %v1110 = vpop.permute.xlu0 %1109
        %1111 = vrot.lane.b32.xlu0 %v1030, 127
        %v1112 = vpop.permute.xlu0 %1111
        %1113 = vrot.lane.b32.xlu0 %v1031, 127
        %v1114 = vpop.permute.xlu0 %1113
        %1115 = vrot.lane.b32.xlu0 %v1032, 127
        %v1116 = vpop.permute.xlu0 %1115
        %v1117 = vadd.f32 %v1102, %v1110
        %v1118 = vadd.f32 %v1104, %v1112
        %v1119 = vadd.f32 %v1106, %v1114
        %v1120 = vadd.f32 %v1108, %v1116
        %v1121 = vmul.f32 %v927, 0.1478
        %v1122 = vmul.f32 %v928, 0.1478
        %v1123 = vmul.f32 %v929, 0.1478
        %v1124 = vmul.f32 %v930, 0.1478
        %v1125 = vmul.f32 %v1053, 0.1183
        %v1126 = vmul.f32 %v1054, 0.1183
        %v1127 = vmul.f32 %v1055, 0.1183
        %v1128 = vmul.f32 %v1056, 0.1183
        %v1129 = vadd.f32 %v1121, %v1125
        %v1130 = vadd.f32 %v1122, %v1126
        %v1131 = vadd.f32 %v1123, %v1127
        %v1132 = vadd.f32 %v1124, %v1128
        %v1133 = vmul.f32 %v1117, 0.0947
        %v1134 = vmul.f32 %v1118, 0.0947
        %v1135 = vmul.f32 %v1119, 0.0947
        %v1136 = vmul.f32 %v1120, 0.0947
        %v1137 = vadd.f32 %v1129, %v1133
        %v1138 = vadd.f32 %v1130, %v1134
        %v1139 = vadd.f32 %v1131, %v1135
        %v1140 = vadd.f32 %v1132, %v1136
        %v1141 = vadd.s32 %v937, 8
        %v1142 = vadd.s32 %v937, 16
        %v1143 = vadd.s32 %v937, 24
        %s1144 = smul.u32 %s49, 16
        %v1145 = vstv %s1144
        %v1146 = vadd.s32 %v1145, %v937
        %v1147 = vadd.s32 %v1145, %v1141
        %v1148 = vadd.s32 %v1145, %v1142
        %v1149 = vadd.s32 %v1145, %v1143
        %v1150 = vsub.s32 %v1146, 8
        %v1151 = vsub.s32 %v1147, 8
        %v1152 = vsub.s32 %v1148, 8
        %v1153 = vsub.s32 %v1149, 8
        %vm1154 = vcmp.ge.s32.totalorder %v1150, 0
        %vm1155 = vcmp.ge.s32.totalorder %v1151, 0
        %vm1156 = vcmp.ge.s32.totalorder %v1152, 0
        %vm1157 = vcmp.ge.s32.totalorder %v1153, 0
        %vm1158 = vcmp.lt.s32.totalorder %v1150, 16
        %vm1159 = vcmp.lt.s32.totalorder %v1151, 16
        %vm1160 = vcmp.lt.s32.totalorder %v1152, 16
        %vm1161 = vcmp.lt.s32.totalorder %v1153, 16
        %vm1162 = vmand %vm1154, %vm1158
        %vm1163 = vmand %vm1155, %vm1159
        %vm1164 = vmand %vm1156, %vm1160
        %vm1165 = vmand %vm1157, %vm1161
        %v1166 = vsel %vm1162, 1, 0
        %v1167 = vsel %vm1163, 1, 0
        %v1168 = vsel %vm1164, 1, 0
        %v1169 = vsel %vm1165, 1, 0
        %v1170 = vcvt.s32.f32 %v1166
        %v1171 = vcvt.s32.f32 %v1167
        %v1172 = vcvt.s32.f32 %v1168
        %v1173 = vcvt.s32.f32 %v1169
        %vm1174 = vcmp.lt.s32.totalorder %v932, 16
        %v1175 = vsel %vm1174, 1, 0
        %v1176 = vcvt.s32.f32 %v1175
        %v1177 = vmul.f32 %v1170, %v1176
        %v1178 = vmul.f32 %v1171, %v1176
        %v1179 = vmul.f32 %v1172, %v1176
        %v1180 = vmul.f32 %v1173, %v1176
        %v1181 = vmul.f32 %v1097, %v1177
        %v1182 = vmul.f32 %v1098, %v1178
        %v1183 = vmul.f32 %v1099, %v1179
        %v1184 = vmul.f32 %v1100, %v1180
        %v1185 = vmul.f32 %v1137, %v1177
        %v1186 = vmul.f32 %v1138, %v1178
        %v1187 = vmul.f32 %v1139, %v1179
        %v1188 = vmul.f32 %v1140, %v1180
        %v1189 = vrot.slane %v1181, 7
        %v1190 = vrot.slane %v1182, 7
        %v1191 = vrot.slane %v1183, 7
        %v1192 = vsel %vm938, %v1190, %v1191
        %v1193 = vsel %vm938, %v1189, %v1190
        %v1194 = vrot.slane %v1182, 1
        %v1195 = vrot.slane %v1183, 1
        %v1196 = vrot.slane %v1184, 1
        %v1197 = vsel %vm944, %v1195, %v1196
        %v1198 = vsel %vm944, %v1194, %v1195
        %v1199 = vadd.f32 %v1193, %v1198
        %v1200 = vadd.f32 %v1192, %v1197
        %1201 = vrot.lane.b32.xlu0 %v1182, 1
        %v1202 = vpop.permute.xlu0 %1201
        %1203 = vrot.lane.b32.xlu0 %v1183, 1
        %v1204 = vpop.permute.xlu0 %1203
        %1205 = vrot.lane.b32.xlu0 %v1182, 127
        %v1206 = vpop.permute.xlu0 %1205
        %1207 = vrot.lane.b32.xlu0 %v1183, 127
        %v1208 = vpop.permute.xlu0 %1207
        %v1209 = vadd.f32 %v1202, %v1206
        %v1210 = vadd.f32 %v1204, %v1208
        %v1211 = vadd.f32 %v1199, %v1209
        %v1212 = vadd.f32 %v1200, %v1210
        %v1213 = vmul.f32 %v1182, 4.0
        %v1214 = vmul.f32 %v1183, 4.0
        %v1215 = vsub.f32 %v1211, %v1213
        %v1216 = vsub.f32 %v1212, %v1214
        %v1217 = vand.u32 2147483647, %v1215
        %v1218 = vand.u32 2147483647, %v1216
        %v1219 = vrot.slane %v1185, 7
        %v1220 = vrot.slane %v1186, 7
        %v1221 = vrot.slane %v1187, 7
        %v1222 = vsel %vm938, %v1220, %v1221
        %v1223 = vsel %vm938, %v1219, %v1220
        %v1224 = vrot.slane %v1186, 1
        %v1225 = vrot.slane %v1187, 1
        %v1226 = vrot.slane %v1188, 1
        %v1227 = vsel %vm944, %v1225, %v1226
        %v1228 = vsel %vm944, %v1224, %v1225
        %v1229 = vadd.f32 %v1223, %v1228
        %v1230 = vadd.f32 %v1222, %v1227
        %1231 = vrot.lane.b32.xlu0 %v1186, 1
        %v1232 = vpop.permute.xlu0 %1231
        %1233 = vrot.lane.b32.xlu0 %v1187, 1
        %v1234 = vpop.permute.xlu0 %1233
        %1235 = vrot.lane.b32.xlu0 %v1186, 127
        %v1236 = vpop.permute.xlu0 %1235
        %1237 = vrot.lane.b32.xlu0 %v1187, 127
        %v1238 = vpop.permute.xlu0 %1237
        %v1239 = vadd.f32 %v1232, %v1236
        %v1240 = vadd.f32 %v1234, %v1238
        %v1241 = vadd.f32 %v1229, %v1239
        %v1242 = vadd.f32 %v1230, %v1240
        %v1243 = vmul.f32 %v1186, 4.0
        %v1244 = vmul.f32 %v1187, 4.0
        %v1245 = vsub.f32 %v1241, %v1243
        %v1246 = vsub.f32 %v1242, %v1244
        %v1247 = vand.u32 2147483647, %v1245
        %v1248 = vand.u32 2147483647, %v1246
        %vm1249 = vcmp.gt.f32.partialorder %v1217, %v1247
        %vm1250 = vcmp.gt.f32.partialorder %v1218, %v1248
        %v1251 = vsel %vm1249, 1.0, 0.0
        %v1252 = vsel %vm1250, 1.0, 0.0
        %v1253 = vsub.f32 1.0, %v1251
        %v1254 = vsub.f32 1.0, %v1252
        %v1255 = vsub.f32 %v963, %v1011
        %v1256 = vsub.f32 %v964, %v1012
        %v1257 = vmul.f32 %v1255, %v1255
        %v1258 = vmul.f32 %v1256, %v1256
        %v1259 = vmul.f32 %v1251, %v1257
        %v1260 = vmul.f32 %v1252, %v1258
        %v1261 = vsub.f32 %v963, %v1059
        %v1262 = vsub.f32 %v964, %v1060
        %v1263 = vmul.f32 %v1261, %v1261
        %v1264 = vmul.f32 %v1262, %v1262
        %v1265 = vmul.f32 %v1253, %v1263
        %v1266 = vmul.f32 %v1254, %v1264
        %v1267 = vadd.f32 %v1259, %v1265
        %v1268 = vadd.f32 %v1260, %v1266
        %v1269 = vmul.f32 %v1267, %v1178
        %v1270 = vmul.f32 %v1268, %v1179
        %v1271 = vpack.c.bf16 %v1251, %v1251
        %v1272 = vpack.c.bf16 %v1252, %v1252
        %1273 = vst [vmem:[%s842] sm:$0xf] %v1271
        %1274 = vst [vmem:[%s842 + $0x4] sm:$0xf] %v1272
        %v1275 = vpack.c.bf16 %v1253, %v1253
        %v1276 = vpack.c.bf16 %v1254, %v1254
        %1277 = vst [vmem:[%s849] sm:$0xf] %v1275
        %1278 = vst [vmem:[%s849 + $0x4] sm:$0xf] %v1276
        %v1279 = vadd.f32 %v1269, %v1270
        %1280 = vst [vmem:[%s856] sm:$0xff] %v1279
        %s1281 = sand.u32 %s366, 1
        %s1282 = scalar_lea.sflag [#allocation7], %s1281
        %s1283 = sand.u32 %s366, 1
        %s1284 = smul.addr %s1283, 8
        %s1285 = scalar_lea.vmem [#allocation20], %s1284
        %s1286 = sand.u32 %s44, 1
        %s1287 = scalar_lea.sflag [#allocation22], %s1286
        %s1288 = sand.u32 %s394, 1
        %s1289 = smul.addr %s1288, 8
        %s1290 = scalar_lea.vmem [#allocation21], %s1289
        %s1291 = sand.u32 %s44, 1
        %s1292 = scalar_lea.sflag [#allocation22], %s1291
        %s1293 = sand.u32 %s422, 1
        %s1294 = smul.addr %s1293, 8
        %s1295 = scalar_lea.vmem [#allocation23], %s1294
        // Predicated region
        $region93: #{tpu_custom_call.1} parent=55 // pred_check
          %p1296 = pneg %p376
        $region94: #{tpu_custom_call.1} parent=55 // pred_check_branch
          %1298 = sbr.rel (%p1296) target = $region96
        $region95: #{tpu_custom_call.1} parent=55 // pred_region
          %s1299 = smul.u32 2, %s49
          %1301 = vsyncadd %s1282, 0
          %s1302 = smul.addr %s48, 2
          %s1303 = sadd.s32 %s1299, %s1302
          %s1304 = smul.addr %s1303, 4
          %s1305 = scalar_lea.hbm %s9, %s1304
          %s1306 = sshll.u32 %s1285, 4
          %s1307 = int_to_ptr.vmem [resolvable:$true] %s1306
          %s1308 = sshll.u32 %s1305, 4
          %s1309 = int_to_ptr.hbm [resolvable:$true] %s1308
          %1314 = dma.vmem_to_hbm [thread:$0]  %s1307, 128, %s1309, %s1282, 64, 64, 4
        $region96: #{tpu_custom_call.1} parent=55 // pred_fallthru
          _
        // Predicated region
        $region97: #{tpu_custom_call.1} parent=55 // pred_check
          %p1315 = pneg %p404
        $region98: #{tpu_custom_call.1} parent=55 // pred_check_branch
          %1317 = sbr.rel (%p1315) target = $region100
        $region99: #{tpu_custom_call.1} parent=55 // pred_region
          %s1318 = smul.u32 2, %s49
          %1320 = vsyncadd %s1287, 0
          %s1321 = smul.addr %s48, 2
          %s1322 = sadd.s32 %s1318, %s1321
          %s1323 = smul.addr %s1322, 4
          %s1324 = scalar_lea.hbm %s10, %s1323
          %s1325 = sshll.u32 %s1290, 4
          %s1326 = int_to_ptr.vmem [resolvable:$true] %s1325
          %s1327 = sshll.u32 %s1324, 4
          %s1328 = int_to_ptr.hbm [resolvable:$true] %s1327
          %1333 = dma.vmem_to_hbm [thread:$0]  %s1326, 128, %s1328, %s1287, 64, 64, 4
        $region100: #{tpu_custom_call.1} parent=55 // pred_fallthru
          _
        // Predicated region
        $region101: #{tpu_custom_call.1} parent=55 // pred_check
          %p1334 = pneg %p432
        $region102: #{tpu_custom_call.1} parent=55 // pred_check_branch
          %1336 = sbr.rel (%p1334) target = $region104
        $region103: #{tpu_custom_call.1} parent=55 // pred_region
          %1338 = vsyncadd %s1292, 0
          %s1339 = sadd.s32 %s49, %s48
          %s1340 = smul.addr %s1339, 8
          %s1341 = scalar_lea.hbm %s11, %s1340
          %s1343 = sshll.u32 %s1295, 4
          %s1344 = int_to_ptr.vmem [resolvable:$true] %s1343
          %s1345 = sshll.u32 %s1341, 4
          %s1346 = int_to_ptr.hbm [resolvable:$true] %s1345
          %1348 = dma.vmem_to_hbm [thread:$0]  %s1344, 128, %s1346, %s1292
        $region104: #{tpu_custom_call.1} parent=55 // pred_fallthru
          _
      $region56: #{tpu_custom_call.1} parent=5 // pred_fallthru
        _
      %p1349 = scmp.le.s32.totalorder 2, %s39
      // Predicated region
      $region105: #{tpu_custom_call.1} parent=5 // pred_check
        %p1350 = pneg %p1349
      $region106: #{tpu_custom_call.1} parent=5 // pred_check_branch
        %1352 = sbr.rel (%p1350) target = $region108
      $region107: #{tpu_custom_call.1} parent=5 // pred_region
        %s1353 = ssub.s32 %s39, 2
        // Predicated region
        $region109: #{tpu_custom_call.1} parent=107 // pred_check
          %p1354 = pneg %p382
        $region110: #{tpu_custom_call.1} parent=107 // pred_check_branch
          %1356 = sbr.rel (%p1354) target = $region112
        $region111: #{tpu_custom_call.1} parent=107 // pred_region
          %s1357 = sand.u32 %s367, 1
          %s1358 = scalar_lea.sflag [#allocation7], %s1357
          %s1359 = sand.u32 %s367, 1
          %s1360 = smul.addr %s1359, 8
          %s1361 = scalar_lea.vmem [#allocation20], %s1360
          %1363 = dma.done %s1358, 128
        $region112: #{tpu_custom_call.1} parent=107 // pred_fallthru
          _
        // Predicated region
        $region113: #{tpu_custom_call.1} parent=107 // pred_check
          %p1364 = pneg %p410
        $region114: #{tpu_custom_call.1} parent=107 // pred_check_branch
          %1366 = sbr.rel (%p1364) target = $region116
        $region115: #{tpu_custom_call.1} parent=107 // pred_region
          %s1367 = sand.u32 %s45, 1
          %s1368 = scalar_lea.sflag [#allocation22], %s1367
          %s1369 = sand.u32 %s395, 1
          %s1370 = smul.addr %s1369, 8
          %s1371 = scalar_lea.vmem [#allocation21], %s1370
          %1373 = dma.done %s1368, 128
        $region116: #{tpu_custom_call.1} parent=107 // pred_fallthru
          _
        // Predicated region
        $region117: #{tpu_custom_call.1} parent=107 // pred_check
          %p1374 = pneg %p438
        $region118: #{tpu_custom_call.1} parent=107 // pred_check_branch
          %1376 = sbr.rel (%p1374) target = $region120
        $region119: #{tpu_custom_call.1} parent=107 // pred_region
          %s1377 = sand.u32 %s45, 1
          %s1378 = scalar_lea.sflag [#allocation22], %s1377
          %s1379 = sand.u32 %s423, 1
          %s1380 = smul.addr %s1379, 8
          %s1381 = scalar_lea.vmem [#allocation23], %s1380
          %1383 = dma.done %s1378, 128
        $region120: #{tpu_custom_call.1} parent=107 // pred_fallthru
          _
      $region108: #{tpu_custom_call.1} parent=5 // pred_fallthru
        _
    $region6: #{tpu_custom_call.1} parent=1 // loop_footer
      %s43 = sadd.s32 1, %s39
    $region7: #{tpu_custom_call.1} parent=1 // loop_footer_branch
      %38 = sbr.rel target = $region3
    $region8: #{tpu_custom_call.1} parent=1 // loop_exit
      _
    %1384 = vsyncpa [#allocation6], 1
    %s1385 = scalar_lea.sflag [#allocation6], 1
    %1386 = vsyncpa %s1385, 1
    %1387 = vsyncpa [#allocation9], 1
    %s1388 = scalar_lea.sflag [#allocation9], 1
    %1389 = vsyncpa %s1388, 1
    %1390 = vsyncpa [#allocation12], 1
    %s1391 = scalar_lea.sflag [#allocation12], 1
    %1392 = vsyncpa %s1391, 1
    %1393 = vsyncpa [#allocation15], 1
    %s1394 = scalar_lea.sflag [#allocation15], 1
    %1395 = vsyncpa %s1394, 1
    %1396 = vsyncpa [#allocation18], 1
    %s1397 = scalar_lea.sflag [#allocation18], 1
    %1398 = vsyncpa %s1397, 1
    %1399 = vsyncpa [#allocation7], 1
    %s1400 = scalar_lea.sflag [#allocation7], 1
    %1401 = vsyncpa %s1400, 1
    %1402 = vsyncpa [#allocation22], 1
    %s1403 = scalar_lea.sflag [#allocation22], 1
    %1404 = vsyncpa %s1403, 1

</llo_original>
